<compile_context>
chip_gen: v5e
topology: v5e:2x2
jax: 0.10.0
libtpu: 0.0.40
codegen_flags: <defaults>
</compile_context>

<pallas_src>
import functools

import jax
import jax.numpy as jnp
from jax.experimental import pallas as pl
from jax.experimental.pallas import tpu as pltpu

HIDDEN = 4096
LANES = 128


def _round_up(x, m):
    return (x + m - 1) // m * m


def _mlp_kernel(x_ref, w1_ref, b1_ref, w2_ref, b2_ref, o_ref):
    """Fused 2-layer MLP. Grid = (batch_tiles, hidden_tiles).

    For each hidden chunk: relu(x @ W1_chunk + b1_chunk) @ W2_chunk, accumulated
    directly into the resident f32 output block. b2 is added on the first chunk.
    """
    k = pl.program_id(1)

    xb = x_ref[...].astype(jnp.bfloat16)
    h = jnp.dot(xb, w1_ref[...], preferred_element_type=jnp.float32)
    h = jnp.maximum(h + b1_ref[...], 0.0)  # ReLU, f32
    partial = jnp.dot(
        h.astype(jnp.bfloat16), w2_ref[...], preferred_element_type=jnp.float32
    )

    @pl.when(k == 0)
    def _():
        o_ref[...] = partial + b2_ref[...]

    @pl.when(k > 0)
    def _():
        o_ref[...] += partial


def _pick_hidden_tile(D, H, C_pad, batch_tile, budget_bytes=20 << 20):
    """Largest hidden chunk whose (double-buffered) blocks fit the VMEM budget."""
    for ht in (H, 2048, 1024, 512, 256, 128):
        if ht > H or H % ht != 0:
            continue
        w1_bytes = 2 * D * ht * 2            # bf16, double-buffered
        w2_bytes = 2 * ht * C_pad * 2        # bf16, double-buffered
        b1_bytes = 2 * ht * 4
        x_bytes = 2 * batch_tile * D * 4
        out_bytes = 2 * batch_tile * C_pad * 4
        h_bytes = batch_tile * ht * 4        # in-kernel intermediate
        if w1_bytes + w2_bytes + b1_bytes + x_bytes + out_bytes + h_bytes <= budget_bytes:
            return ht
    return 128


@jax.jit
def linear_classifier_forward(x, w1, b1, w2, b2):
    """x: (B, D) f32; w1: (D, H); b1: (1, H); w2: (H, C); b2: (1, C)."""
    B, D = x.shape
    H = w1.shape[1]
    C = w2.shape[1]

    # --- batch tiling (pad B to a multiple of the tile; tile multiple of 8) ---
    batch_tile = min(256, _round_up(B, 8))
    B_pad = _round_up(B, batch_tile)

    # --- lane-dense logits: pad C to a multiple of 128 with zero weights/bias ---
    C_pad = _round_up(C, LANES)

    # --- hidden chunking sized against a conservative VMEM budget ---
    hidden_tile = _pick_hidden_tile(D, H, C_pad, batch_tile)

    # --- prepare operands: bf16 weights, zero padding ---
    w1b = w1.astype(jnp.bfloat16)
    w2b = jnp.zeros((H, C_pad), jnp.bfloat16).at[:, :C].set(w2.astype(jnp.bfloat16))
    b2p = jnp.zeros((1, C_pad), jnp.float32).at[:, :C].set(b2.astype(jnp.float32))
    b1f = b1.astype(jnp.float32)
    xp = x
    if B_pad != B:
        xp = jnp.zeros((B_pad, D), x.dtype).at[:B, :].set(x)

    grid = (B_pad // batch_tile, H // hidden_tile)

    out = pl.pallas_call(
        _mlp_kernel,
        out_shape=jax.ShapeDtypeStruct((B_pad, C_pad), jnp.float32),
        grid_spec=pltpu.PrefetchScalarGridSpec(
            num_scalar_prefetch=0,
            grid=grid,
            in_specs=[
                pl.BlockSpec((batch_tile, D), lambda i, k: (i, 0)),        # x tile
                pl.BlockSpec((D, hidden_tile), lambda i, k: (0, k)),       # W1 chunk
                pl.BlockSpec((1, hidden_tile), lambda i, k: (0, k)),       # b1 chunk
                pl.BlockSpec((hidden_tile, C_pad), lambda i, k: (k, 0)),   # W2 chunk
                pl.BlockSpec((1, C_pad), lambda i, k: (0, 0)),             # b2
            ],
            out_specs=pl.BlockSpec((batch_tile, C_pad), lambda i, k: (i, 0)),
        ),
        compiler_params=pltpu.CompilerParams(
            dimension_semantics=("parallel", "arbitrary"),
            vmem_limit_bytes=32 * 1024 * 1024,
        ),
    )(xp, w1b, b1f, w2b, b2p)

    return out[:B, :C].astype(x.dtype)


def init_params(key, input_dim, nclass):
    """Deterministic init matching PyTorch nn.Linear default (U(-1/sqrt(fan_in), ...))."""
    k1, k2, k3, k4 = jax.random.split(key, 4)
    bound1 = 1.0 / jnp.sqrt(input_dim)
    bound2 = 1.0 / jnp.sqrt(HIDDEN)
    w1 = jax.random.uniform(k1, (input_dim, HIDDEN), jnp.float32, -bound1, bound1)
    b1 = jax.random.uniform(k2, (1, HIDDEN), jnp.float32, -bound1, bound1)
    w2 = jax.random.uniform(k3, (HIDDEN, nclass), jnp.float32, -bound2, bound2)
    b2 = jax.random.uniform(k4, (1, nclass), jnp.float32, -bound2, bound2)
    return w1, b1, w2, b2


if __name__ == "__main__":
    key = jax.random.PRNGKey(0)
    kx, kp = jax.random.split(key)

    B, D, NCLASS = 8, 32, 16
    x = jax.random.normal(kx, (B, D), jnp.float32)
    w1, b1, w2, b2 = init_params(kp, D, NCLASS)

    out = linear_classifier_forward(x, w1, b1, w2, b2)
    out = jax.block_until_ready(out)
    assert out.shape == (B, NCLASS)

    # Reference mirroring the kernel's mixed-precision path (bf16 operands,
    # f32 accumulation) — tight tolerance.
    xb = x.astype(jnp.bfloat16)
    h_ref = jnp.maximum(
        jnp.dot(xb, w1.astype(jnp.bfloat16), preferred_element_type=jnp.float32) + b1,
        0.0,
    )
    ref_bf16 = (
        jnp.dot(h_ref.astype(jnp.bfloat16), w2.astype(jnp.bfloat16),
                preferred_element_type=jnp.float32)
        + b2
    )
    assert jnp.allclose(out, ref_bf16, atol=2e-3, rtol=2e-3), "mismatch vs bf16-path reference"

    # Full-f32 reference — loose tolerance (bf16 weight rounding).
    ref_f32 = jnp.maximum(x @ w1 + b1, 0.0) @ w2 + b2
    assert jnp.allclose(out, ref_f32, atol=5e-2, rtol=5e-2), "mismatch vs f32 reference"

    print("KERNEL_OK")
</pallas_src>

<mosaic_0001>
module attributes {stable_mosaic.version = 11 : i64} {
  func.func @_mlp_kernel(%arg0: i32, %arg1: i32, %arg2: memref<8x32xf32, #tpu.memory_space<vmem>>, %arg3: memref<32x4096xbf16, #tpu.memory_space<vmem>>, %arg4: memref<1x4096xf32, #tpu.memory_space<vmem>>, %arg5: memref<4096x128xbf16, #tpu.memory_space<vmem>>, %arg6: memref<1x128xf32, #tpu.memory_space<vmem>>, %arg7: memref<8x128xf32, #tpu.memory_space<vmem>>) attributes {dimension_semantics = [#tpu.dimension_semantics<parallel>, #tpu.dimension_semantics<arbitrary>], iteration_bounds = array<i64: 1, 1>, scalar_prefetch = 0 : i64, scratch_operands = 0 : i64, tpu.core_type = #tpu.core_type<tc>, window_params = [{transform_indices = @transform_0, window_bounds = array<i64: 8, 32>}, {transform_indices = @transform_1, window_bounds = array<i64: 32, 4096>}, {transform_indices = @transform_2, window_bounds = array<i64: 1, 4096>}, {transform_indices = @transform_3, window_bounds = array<i64: 4096, 128>}, {pipeline_mode = #tpu.pipeline_mode<synchronous>, transform_indices = @transform_4, window_bounds = array<i64: 1, 128>}, {transform_indices = @transform_5, window_bounds = array<i64: 8, 128>}]} {
    %c0 = arith.constant 0 : index
    %c0_0 = arith.constant 0 : index
    %0 = vector.load %arg2[%c0, %c0_0] : memref<8x32xf32, #tpu.memory_space<vmem>>, vector<8x32xf32>
    %1 = arith.truncf %0 : vector<8x32xf32> to vector<8x32xbf16>
    %c0_1 = arith.constant 0 : index
    %c0_2 = arith.constant 0 : index
    %2 = vector.load %arg3[%c0_1, %c0_2] : memref<32x4096xbf16, #tpu.memory_space<vmem>>, vector<32x4096xbf16>
    %cst = arith.constant dense<0.000000e+00> : vector<8x4096xf32>
    %3 = tpu.matmul %1, %2, %cst {dimension_numbers = #tpu.dot_dimension_numbers<[1], [0], [0], [1], [0, 0, 1, 1], [], []>} : vector<8x32xbf16>, vector<32x4096xbf16>, vector<8x4096xf32> -> vector<8x4096xf32>
    %c0_3 = arith.constant 0 : index
    %c0_4 = arith.constant 0 : index
    %4 = vector.load %arg4[%c0_3, %c0_4] : memref<1x4096xf32, #tpu.memory_space<vmem>>, vector<1x4096xf32>
    %5 = vector.broadcast %4 : vector<1x4096xf32> to vector<8x4096xf32>
    %6 = arith.addf %3, %5 : vector<8x4096xf32>
    %cst_5 = arith.constant 0.000000e+00 : f32
    %7 = vector.broadcast %cst_5 : f32 to vector<8x4096xf32>
    %8 = arith.maximumf %6, %7 : vector<8x4096xf32>
    %9 = arith.truncf %8 : vector<8x4096xf32> to vector<8x4096xbf16>
    %c0_6 = arith.constant 0 : index
    %c0_7 = arith.constant 0 : index
    %10 = vector.load %arg5[%c0_6, %c0_7] : memref<4096x128xbf16, #tpu.memory_space<vmem>>, vector<4096x128xbf16>
    %cst_8 = arith.constant dense<0.000000e+00> : vector<8x128xf32>
    %11 = tpu.matmul %9, %10, %cst_8 {dimension_numbers = #tpu.dot_dimension_numbers<[1], [0], [0], [1], [0, 0, 1, 1], [], []>} : vector<8x4096xbf16>, vector<4096x128xbf16>, vector<8x128xf32> -> vector<8x128xf32>
    %c0_i32 = arith.constant 0 : i32
    %12 = arith.cmpi eq, %arg1, %c0_i32 : i32
    %13 = arith.extui %12 : i1 to i32
    %c0_i32_9 = arith.constant 0 : i32
    %14 = arith.cmpi ne, %13, %c0_i32_9 : i32
    scf.if %14 {
      %c0_12 = arith.constant 0 : index
      %c0_13 = arith.constant 0 : index
      %18 = vector.load %arg6[%c0_12, %c0_13] : memref<1x128xf32, #tpu.memory_space<vmem>>, vector<1x128xf32>
      %19 = vector.broadcast %18 : vector<1x128xf32> to vector<8x128xf32>
      %20 = arith.addf %11, %19 : vector<8x128xf32>
      %c0_14 = arith.constant 0 : index
      %c0_15 = arith.constant 0 : index
      %21 = vector.load %arg7[%c0_14, %c0_15] : memref<8x128xf32, #tpu.memory_space<vmem>>, vector<8x128xf32>
      tpu.vector_store %arg7[%c0_14, %c0_15], %20 {strides = array<i32>} : memref<8x128xf32, #tpu.memory_space<vmem>>, vector<8x128xf32>,
    } else {
    }
    %c0_i32_10 = arith.constant 0 : i32
    %15 = arith.cmpi sgt, %arg1, %c0_i32_10 : i32
    %16 = arith.extui %15 : i1 to i32
    %c0_i32_11 = arith.constant 0 : i32
    %17 = arith.cmpi ne, %16, %c0_i32_11 : i32
    scf.if %17 {
      %c0_12 = arith.constant 0 : index
      %c0_13 = arith.constant 0 : index
      %18 = vector.load %arg7[%c0_12, %c0_13] : memref<8x128xf32, #tpu.memory_space<vmem>>, vector<8x128xf32>
      %19 = arith.addf %18, %11 : vector<8x128xf32>
      %c0_14 = arith.constant 0 : index
      %c0_15 = arith.constant 0 : index
      %20 = vector.load %arg7[%c0_14, %c0_15] : memref<8x128xf32, #tpu.memory_space<vmem>>, vector<8x128xf32>
      tpu.vector_store %arg7[%c0_14, %c0_15], %19 {strides = array<i32>} : memref<8x128xf32, #tpu.memory_space<vmem>>, vector<8x128xf32>,
    } else {
    }
    return
  }
  func.func @transform_0(%arg0: i32, %arg1: i32) -> (i32, i32) {
    %c0_i32 = arith.constant 0 : i32
    %c0_i32_0 = arith.constant 0 : i32
    return %arg0, %c0_i32 : i32, i32
  }
  func.func @transform_1(%arg0: i32, %arg1: i32) -> (i32, i32) {
    %c0_i32 = arith.constant 0 : i32
    %c0_i32_0 = arith.constant 0 : i32
    return %c0_i32, %arg1 : i32, i32
  }
  func.func @transform_2(%arg0: i32, %arg1: i32) -> (i32, i32) {
    %c0_i32 = arith.constant 0 : i32
    %c0_i32_0 = arith.constant 0 : i32
    return %c0_i32, %arg1 : i32, i32
  }
  func.func @transform_3(%arg0: i32, %arg1: i32) -> (i32, i32) {
    %c0_i32 = arith.constant 0 : i32
    %c0_i32_0 = arith.constant 0 : i32
    return %arg1, %c0_i32 : i32, i32
  }
  func.func @transform_4(%arg0: i32, %arg1: i32) -> (i32, i32) {
    %c0_i32 = arith.constant 0 : i32
    %c0_i32_0 = arith.constant 0 : i32
    %c0_i32_1 = arith.constant 0 : i32
    return %c0_i32, %c0_i32_0 : i32, i32
  }
  func.func @transform_5(%arg0: i32, %arg1: i32) -> (i32, i32) {
    %c0_i32 = arith.constant 0 : i32
    %c0_i32_0 = arith.constant 0 : i32
    return %arg0, %c0_i32 : i32, i32
  }
}

</mosaic_0001>

<llo_original>
// kernel: linear_classifier_forward.1
$region0: #{linear_classifier_forward.1}
  #allocation0 [shape = 'u32[]', space=smem, size = 0x4, offset = 0x4, fixed_abs, tag = 'smem constant byte address 0x4 - core index']
  #allocation1 [shape = 'u32[72,128]{1,0:T(1,128)}', space=vmem, size = 0x9000, scoped, tag = 'internal scratch']
  %s0 = inlined_call_operand.vmem [shape: f32[8,32], index: 0, kind: input, shape index: {}]
  %s1 = inlined_call_operand.vmem [shape: bf16[32,4096], index: 1, kind: input, shape index: {}]
  %s2 = inlined_call_operand.vmem [shape: f32[1,4096], index: 2, kind: input, shape index: {}]
  %s3 = inlined_call_operand.vmem [shape: bf16[4096,128], index: 3, kind: input, shape index: {}]
  %s4 = inlined_call_operand.vmem [shape: f32[1,128], index: 4, kind: input, shape index: {}]
  %s5 = inlined_call_operand.hbm [shape: f32[8,128], index: 5, kind: output, shape index: {}]
  %s6 = sld [smem:[#allocation0]]
  $region38: #{linear_classifier_forward.1} parent=0
    _
  %s8 = ssub.s32 1, %s6
  %s9 = scalar_select 0, %s8, %s6
  $region1: #{linear_classifier_forward.1} parent=0
    #allocation2 [shape = 'u8[4096]{0}', space=vmem, size = 0x1000, scoped, tag = 'output window, operand 0, single buffered']
    #allocation3 [shape = 's32[1]{0}', space=sflag, size = 0x4, scoped, tag = 'scoped memory for linear_classifier_forward.1']
    %10 = vsyncpa [#allocation3], 0
    // Predicated region
    $region2: #{linear_classifier_forward.1} parent=1 // pred_check
      _
    $region3: #{linear_classifier_forward.1} parent=1 // pred_check_branch
      %12 = sbr.rel (0) target = $region5
    $region4: #{linear_classifier_forward.1} parent=1 // pred_region
      _
    $region5: #{linear_classifier_forward.1} parent=1 // pred_fallthru
      _
    // Predicated region
    $region6: #{linear_classifier_forward.1} parent=1 // pred_check
      _
    $region7: #{linear_classifier_forward.1} parent=1 // pred_check_branch
      %14 = sbr.rel (0) target = $region9
    $region8: #{linear_classifier_forward.1} parent=1 // pred_region
      _
    $region9: #{linear_classifier_forward.1} parent=1 // pred_fallthru
      _
    // Predicated region
    $region10: #{linear_classifier_forward.1} parent=1 // pred_check
      _
    $region11: #{linear_classifier_forward.1} parent=1 // pred_check_branch
      %16 = sbr.rel (0) target = $region13
    $region12: #{linear_classifier_forward.1} parent=1 // pred_region
      _
    $region13: #{linear_classifier_forward.1} parent=1 // pred_fallthru
      _
    // Predicated region
    $region14: #{linear_classifier_forward.1} parent=1 // pred_check
      _
    $region15: #{linear_classifier_forward.1} parent=1 // pred_check_branch
      %18 = sbr.rel (0) target = $region17
    $region16: #{linear_classifier_forward.1} parent=1 // pred_region
      _
    $region17: #{linear_classifier_forward.1} parent=1 // pred_fallthru
      _
    // Predicated region
    $region18: #{linear_classifier_forward.1} parent=1 // pred_check
      _
    $region19: #{linear_classifier_forward.1} parent=1 // pred_check_branch
      %20 = sbr.rel (0) target = $region21
    $region20: #{linear_classifier_forward.1} parent=1 // pred_region
      _
    $region21: #{linear_classifier_forward.1} parent=1 // pred_fallthru
      _
    %v22 = vld [vmem:[%s0] sm:$0xff]
    %v23 = vpack.c.bf16 %v22, %v22
    %v24 = vld [vmem:[%s1] sm:$0xff]
    %v25 = vld [vmem:[%s1 + $0x8] sm:$0xff]
    %v26 = vld [vmem:[%s1 + $0x10] sm:$0xff]
    %v27 = vld [vmem:[%s1 + $0x18] sm:$0xff]
    %v28 = vld [vmem:[%s1 + $0x20] sm:$0xff]
    %v29 = vld [vmem:[%s1 + $0x28] sm:$0xff]
    %v30 = vld [vmem:[%s1 + $0x30] sm:$0xff]
    %v31 = vld [vmem:[%s1 + $0x38] sm:$0xff]
    %v32 = vld [vmem:[%s1 + $0x40] sm:$0xff]
    %v33 = vld [vmem:[%s1 + $0x48] sm:$0xff]
    %v34 = vld [vmem:[%s1 + $0x50] sm:$0xff]
    %v35 = vld [vmem:[%s1 + $0x58] sm:$0xff]
    %v36 = vld [vmem:[%s1 + $0x60] sm:$0xff]
    %v37 = vld [vmem:[%s1 + $0x68] sm:$0xff]
    %v38 = vld [vmem:[%s1 + $0x70] sm:$0xff]
    %v39 = vld [vmem:[%s1 + $0x78] sm:$0xff]
    %v40 = vld [vmem:[%s1 + $0x80] sm:$0xff]
    %v41 = vld [vmem:[%s1 + $0x88] sm:$0xff]
    %v42 = vld [vmem:[%s1 + $0x90] sm:$0xff]
    %v43 = vld [vmem:[%s1 + $0x98] sm:$0xff]
    %v44 = vld [vmem:[%s1 + $0xa0] sm:$0xff]
    %v45 = vld [vmem:[%s1 + $0xa8] sm:$0xff]
    %v46 = vld [vmem:[%s1 + $0xb0] sm:$0xff]
    %v47 = vld [vmem:[%s1 + $0xb8] sm:$0xff]
    %v48 = vld [vmem:[%s1 + $0xc0] sm:$0xff]
    %v49 = vld [vmem:[%s1 + $0xc8] sm:$0xff]
    %v50 = vld [vmem:[%s1 + $0xd0] sm:$0xff]
    %v51 = vld [vmem:[%s1 + $0xd8] sm:$0xff]
    %v52 = vld [vmem:[%s1 + $0xe0] sm:$0xff]
    %v53 = vld [vmem:[%s1 + $0xe8] sm:$0xff]
    %v54 = vld [vmem:[%s1 + $0xf0] sm:$0xff]
    %v55 = vld [vmem:[%s1 + $0xf8] sm:$0xff]
    %v56 = vld [vmem:[%s1 + $0x100] sm:$0xff]
    %v57 = vld [vmem:[%s1 + $0x108] sm:$0xff]
    %v58 = vld [vmem:[%s1 + $0x110] sm:$0xff]
    %v59 = vld [vmem:[%s1 + $0x118] sm:$0xff]
    %v60 = vld [vmem:[%s1 + $0x120] sm:$0xff]
    %v61 = vld [vmem:[%s1 + $0x128] sm:$0xff]
    %v62 = vld [vmem:[%s1 + $0x130] sm:$0xff]
    %v63 = vld [vmem:[%s1 + $0x138] sm:$0xff]
    %v64 = vld [vmem:[%s1 + $0x140] sm:$0xff]
    %v65 = vld [vmem:[%s1 + $0x148] sm:$0xff]
    %v66 = vld [vmem:[%s1 + $0x150] sm:$0xff]
    %v67 = vld [vmem:[%s1 + $0x158] sm:$0xff]
    %v68 = vld [vmem:[%s1 + $0x160] sm:$0xff]
    %v69 = vld [vmem:[%s1 + $0x168] sm:$0xff]
    %v70 = vld [vmem:[%s1 + $0x170] sm:$0xff]
    %v71 = vld [vmem:[%s1 + $0x178] sm:$0xff]
    %v72 = vld [vmem:[%s1 + $0x180] sm:$0xff]
    %v73 = vld [vmem:[%s1 + $0x188] sm:$0xff]
    %v74 = vld [vmem:[%s1 + $0x190] sm:$0xff]
    %v75 = vld [vmem:[%s1 + $0x198] sm:$0xff]
    %v76 = vld [vmem:[%s1 + $0x1a0] sm:$0xff]
    %v77 = vld [vmem:[%s1 + $0x1a8] sm:$0xff]
    %v78 = vld [vmem:[%s1 + $0x1b0] sm:$0xff]
    %v79 = vld [vmem:[%s1 + $0x1b8] sm:$0xff]
    %v80 = vld [vmem:[%s1 + $0x1c0] sm:$0xff]
    %v81 = vld [vmem:[%s1 + $0x1c8] sm:$0xff]
    %v82 = vld [vmem:[%s1 + $0x1d0] sm:$0xff]
    %v83 = vld [vmem:[%s1 + $0x1d8] sm:$0xff]
    %v84 = vld [vmem:[%s1 + $0x1e0] sm:$0xff]
    %v85 = vld [vmem:[%s1 + $0x1e8] sm:$0xff]
    %v86 = vld [vmem:[%s1 + $0x1f0] sm:$0xff]
    %v87 = vld [vmem:[%s1 + $0x1f8] sm:$0xff]
    %v88 = vld [vmem:[%s2] sm:$0xff]
    %v89 = vld [vmem:[%s2 + $0x8] sm:$0xff]
    %v90 = vld [vmem:[%s2 + $0x10] sm:$0xff]
    %v91 = vld [vmem:[%s2 + $0x18] sm:$0xff]
    %v96 = vperm.slane %v88, 0
    %v97 = vperm.slane %v88, 1
    %v98 = vperm.slane %v88, 2
    %v99 = vperm.slane %v88, 3
    %v100 = vperm.slane %v88, 4
    %v101 = vperm.slane %v88, 5
    %v102 = vperm.slane %v88, 6
    %v103 = vperm.slane %v88, 7
    %v104 = vperm.slane %v89, 0
    %v105 = vperm.slane %v89, 1
    %v106 = vperm.slane %v89, 2
    %v107 = vperm.slane %v89, 3
    %v108 = vperm.slane %v89, 4
    %v109 = vperm.slane %v89, 5
    %v110 = vperm.slane %v89, 6
    %v111 = vperm.slane %v89, 7
    %v112 = vperm.slane %v90, 0
    %v113 = vperm.slane %v90, 1
    %v114 = vperm.slane %v90, 2
    %v115 = vperm.slane %v90, 3
    %v116 = vperm.slane %v90, 4
    %v117 = vperm.slane %v90, 5
    %v118 = vperm.slane %v90, 6
    %v119 = vperm.slane %v90, 7
    %v120 = vperm.slane %v91, 0
    %v121 = vperm.slane %v91, 1
    %v122 = vperm.slane %v91, 2
    %v123 = vperm.slane %v91, 3
    %v124 = vperm.slane %v91, 4
    %v125 = vperm.slane %v91, 5
    %v126 = vperm.slane %v91, 6
    %v127 = vperm.slane %v91, 7
    %v224 = vunpack.c.l.b16 %v24
    %v225 = vunpack.c.h.b16 %v24
    %v226 = vunpack.c.l.b16 %v25
    %v227 = vunpack.c.h.b16 %v25
    %v228 = vunpack.c.l.b16 %v26
    %v229 = vunpack.c.h.b16 %v26
    %v230 = vunpack.c.l.b16 %v27
    %v231 = vunpack.c.h.b16 %v27
    %v232 = vunpack.c.l.b16 %v28
    %v233 = vunpack.c.h.b16 %v28
    %v234 = vunpack.c.l.b16 %v29
    %v235 = vunpack.c.h.b16 %v29
    %v236 = vunpack.c.l.b16 %v30
    %v237 = vunpack.c.h.b16 %v30
    %v238 = vunpack.c.l.b16 %v31
    %v239 = vunpack.c.h.b16 %v31
    %v240 = vunpack.c.l.b16 %v32
    %v241 = vunpack.c.h.b16 %v32
    %v242 = vunpack.c.l.b16 %v33
    %v243 = vunpack.c.h.b16 %v33
    %v244 = vunpack.c.l.b16 %v34
    %v245 = vunpack.c.h.b16 %v34
    %v246 = vunpack.c.l.b16 %v35
    %v247 = vunpack.c.h.b16 %v35
    %v248 = vunpack.c.l.b16 %v36
    %v249 = vunpack.c.h.b16 %v36
    %v250 = vunpack.c.l.b16 %v37
    %v251 = vunpack.c.h.b16 %v37
    %v252 = vunpack.c.l.b16 %v38
    %v253 = vunpack.c.h.b16 %v38
    %v254 = vunpack.c.l.b16 %v39
    %v255 = vunpack.c.h.b16 %v39
    %v256 = vunpack.c.l.b16 %v40
    %v257 = vunpack.c.h.b16 %v40
    %v258 = vunpack.c.l.b16 %v41
    %v259 = vunpack.c.h.b16 %v41
    %v260 = vunpack.c.l.b16 %v42
    %v261 = vunpack.c.h.b16 %v42
    %v262 = vunpack.c.l.b16 %v43
    %v263 = vunpack.c.h.b16 %v43
    %v264 = vunpack.c.l.b16 %v44
    %v265 = vunpack.c.h.b16 %v44
    %v266 = vunpack.c.l.b16 %v45
    %v267 = vunpack.c.h.b16 %v45
    %v268 = vunpack.c.l.b16 %v46
    %v269 = vunpack.c.h.b16 %v46
    %v270 = vunpack.c.l.b16 %v47
    %v271 = vunpack.c.h.b16 %v47
    %v272 = vunpack.c.l.b16 %v48
    %v273 = vunpack.c.h.b16 %v48
    %v274 = vunpack.c.l.b16 %v49
    %v275 = vunpack.c.h.b16 %v49
    %v276 = vunpack.c.l.b16 %v50
    %v277 = vunpack.c.h.b16 %v50
    %v278 = vunpack.c.l.b16 %v51
    %v279 = vunpack.c.h.b16 %v51
    %v280 = vunpack.c.l.b16 %v52
    %v281 = vunpack.c.h.b16 %v52
    %v282 = vunpack.c.l.b16 %v53
    %v283 = vunpack.c.h.b16 %v53
    %v284 = vunpack.c.l.b16 %v54
    %v285 = vunpack.c.h.b16 %v54
    %v286 = vunpack.c.l.b16 %v55
    %v287 = vunpack.c.h.b16 %v55
    %v288 = vunpack.c.l.b16 %v56
    %v289 = vunpack.c.h.b16 %v56
    %v290 = vunpack.c.l.b16 %v57
    %v291 = vunpack.c.h.b16 %v57
    %v292 = vunpack.c.l.b16 %v58
    %v293 = vunpack.c.h.b16 %v58
    %v294 = vunpack.c.l.b16 %v59
    %v295 = vunpack.c.h.b16 %v59
    %v296 = vunpack.c.l.b16 %v60
    %v297 = vunpack.c.h.b16 %v60
    %v298 = vunpack.c.l.b16 %v61
    %v299 = vunpack.c.h.b16 %v61
    %v300 = vunpack.c.l.b16 %v62
    %v301 = vunpack.c.h.b16 %v62
    %v302 = vunpack.c.l.b16 %v63
    %v303 = vunpack.c.h.b16 %v63
    %v304 = vunpack.c.l.b16 %v64
    %v305 = vunpack.c.h.b16 %v64
    %v306 = vunpack.c.l.b16 %v65
    %v307 = vunpack.c.h.b16 %v65
    %v308 = vunpack.c.l.b16 %v66
    %v309 = vunpack.c.h.b16 %v66
    %v310 = vunpack.c.l.b16 %v67
    %v311 = vunpack.c.h.b16 %v67
    %v312 = vunpack.c.l.b16 %v68
    %v313 = vunpack.c.h.b16 %v68
    %v314 = vunpack.c.l.b16 %v69
    %v315 = vunpack.c.h.b16 %v69
    %v316 = vunpack.c.l.b16 %v70
    %v317 = vunpack.c.h.b16 %v70
    %v318 = vunpack.c.l.b16 %v71
    %v319 = vunpack.c.h.b16 %v71
    %v320 = vunpack.c.l.b16 %v72
    %v321 = vunpack.c.h.b16 %v72
    %v322 = vunpack.c.l.b16 %v73
    %v323 = vunpack.c.h.b16 %v73
    %v324 = vunpack.c.l.b16 %v74
    %v325 = vunpack.c.h.b16 %v74
    %v326 = vunpack.c.l.b16 %v75
    %v327 = vunpack.c.h.b16 %v75
    %v328 = vunpack.c.l.b16 %v76
    %v329 = vunpack.c.h.b16 %v76
    %v330 = vunpack.c.l.b16 %v77
    %v331 = vunpack.c.h.b16 %v77
    %v332 = vunpack.c.l.b16 %v78
    %v333 = vunpack.c.h.b16 %v78
    %v334 = vunpack.c.l.b16 %v79
    %v335 = vunpack.c.h.b16 %v79
    %v336 = vunpack.c.l.b16 %v80
    %v337 = vunpack.c.h.b16 %v80
    %v338 = vunpack.c.l.b16 %v81
    %v339 = vunpack.c.h.b16 %v81
    %v340 = vunpack.c.l.b16 %v82
    %v341 = vunpack.c.h.b16 %v82
    %v342 = vunpack.c.l.b16 %v83
    %v343 = vunpack.c.h.b16 %v83
    %v344 = vunpack.c.l.b16 %v84
    %v345 = vunpack.c.h.b16 %v84
    %v346 = vunpack.c.l.b16 %v85
    %v347 = vunpack.c.h.b16 %v85
    %v348 = vunpack.c.l.b16 %v86
    %v349 = vunpack.c.h.b16 %v86
    %v350 = vunpack.c.l.b16 %v87
    %v351 = vunpack.c.h.b16 %v87
    %v352 = vpack.c.b16 %v256, %v224
    %v353 = vpack.c.b16 %v257, %v225
    %v354 = vpack.c.b16 %v258, %v226
    %v355 = vpack.c.b16 %v259, %v227
    %v356 = vpack.c.b16 %v260, %v228
    %v357 = vpack.c.b16 %v261, %v229
    %v358 = vpack.c.b16 %v262, %v230
    %v359 = vpack.c.b16 %v263, %v231
    %v360 = vpack.c.b16 %v264, %v232
    %v361 = vpack.c.b16 %v265, %v233
    %v362 = vpack.c.b16 %v266, %v234
    %v363 = vpack.c.b16 %v267, %v235
    %v364 = vpack.c.b16 %v268, %v236
    %v365 = vpack.c.b16 %v269, %v237
    %v366 = vpack.c.b16 %v270, %v238
    %v367 = vpack.c.b16 %v271, %v239
    %v368 = vpack.c.b16 %v272, %v240
    %v369 = vpack.c.b16 %v273, %v241
    %v370 = vpack.c.b16 %v274, %v242
    %v371 = vpack.c.b16 %v275, %v243
    %v372 = vpack.c.b16 %v276, %v244
    %v373 = vpack.c.b16 %v277, %v245
    %v374 = vpack.c.b16 %v278, %v246
    %v375 = vpack.c.b16 %v279, %v247
    %v376 = vpack.c.b16 %v280, %v248
    %v377 = vpack.c.b16 %v281, %v249
    %v378 = vpack.c.b16 %v282, %v250
    %v379 = vpack.c.b16 %v283, %v251
    %v380 = vpack.c.b16 %v284, %v252
    %v381 = vpack.c.b16 %v285, %v253
    %v382 = vpack.c.b16 %v286, %v254
    %v383 = vpack.c.b16 %v287, %v255
    %v384 = vpack.c.b16 %v320, %v288
    %v385 = vpack.c.b16 %v321, %v289
    %v386 = vpack.c.b16 %v322, %v290
    %v387 = vpack.c.b16 %v323, %v291
    %v388 = vpack.c.b16 %v324, %v292
    %v389 = vpack.c.b16 %v325, %v293
    %v390 = vpack.c.b16 %v326, %v294
    %v391 = vpack.c.b16 %v327, %v295
    %v392 = vpack.c.b16 %v328, %v296
    %v393 = vpack.c.b16 %v329, %v297
    %v394 = vpack.c.b16 %v330, %v298
    %v395 = vpack.c.b16 %v331, %v299
    %v396 = vpack.c.b16 %v332, %v300
    %v397 = vpack.c.b16 %v333, %v301
    %v398 = vpack.c.b16 %v334, %v302
    %v399 = vpack.c.b16 %v335, %v303
    %v400 = vpack.c.b16 %v336, %v304
    %v401 = vpack.c.b16 %v337, %v305
    %v402 = vpack.c.b16 %v338, %v306
    %v403 = vpack.c.b16 %v339, %v307
    %v404 = vpack.c.b16 %v340, %v308
    %v405 = vpack.c.b16 %v341, %v309
    %v406 = vpack.c.b16 %v342, %v310
    %v407 = vpack.c.b16 %v343, %v311
    %v408 = vpack.c.b16 %v344, %v312
    %v409 = vpack.c.b16 %v345, %v313
    %v410 = vpack.c.b16 %v346, %v314
    %v411 = vpack.c.b16 %v347, %v315
    %v412 = vpack.c.b16 %v348, %v316
    %v413 = vpack.c.b16 %v349, %v317
    %v414 = vpack.c.b16 %v350, %v318
    %v415 = vpack.c.b16 %v351, %v319
    %vm480 = vcmask 261120
    %v482 = vsel %vm480, %v23, 0
    %484 = vmatpush.bf16.msra.mxu0 0
    %485 = vmatpush.bf16.msra.mxu0 0
    %486 = vmatpush.bf16.msra.mxu0 0
    %487 = vmatpush.bf16.msra.mxu0 0
    %488 = vmatpush.bf16.msra.mxu0 0
    %489 = vmatpush.bf16.msra.mxu0 0
    %490 = vmatpush.bf16.msra.mxu0 %v384
    %491 = vmatpush.bf16.msra.mxu0 %v352
    %492 = vmatmul.bf16.gmra.mxu0 %v482
    %v493 = vpop.f32.mrf.mxu0
    %v494 = vadd.f32 %v96, %v493
    %v495 = vpop.f32.mrf.mxu0
    %496 = vdwg.mxu0
    %497 = vmatpush.bf16.msra.mxu0 0
    %498 = vmatpush.bf16.msra.mxu0 0
    %499 = vmatpush.bf16.msra.mxu0 0
    %500 = vmatpush.bf16.msra.mxu0 0
    %501 = vmatpush.bf16.msra.mxu0 0
    %502 = vmatpush.bf16.msra.mxu0 0
    %503 = vmatpush.bf16.msra.mxu0 %v385
    %504 = vmatpush.bf16.msra.mxu0 %v353
    %505 = vmatmul.bf16.gmra.mxu0 %v482
    %v506 = vpop.f32.mrf.mxu0
    %v507 = vadd.f32 %v97, %v506
    %v508 = vpop.f32.mrf.mxu0
    %509 = vdwg.mxu0
    %510 = vmatpush.bf16.msra.mxu0 0
    %511 = vmatpush.bf16.msra.mxu0 0
    %512 = vmatpush.bf16.msra.mxu0 0
    %513 = vmatpush.bf16.msra.mxu0 0
    %514 = vmatpush.bf16.msra.mxu0 0
    %515 = vmatpush.bf16.msra.mxu0 0
    %516 = vmatpush.bf16.msra.mxu0 %v386
    %517 = vmatpush.bf16.msra.mxu0 %v354
    %518 = vmatmul.bf16.gmra.mxu0 %v482
    %v519 = vpop.f32.mrf.mxu0
    %v520 = vadd.f32 %v98, %v519
    %v521 = vpop.f32.mrf.mxu0
    %522 = vdwg.mxu0
    %523 = vmatpush.bf16.msra.mxu0 0
    %524 = vmatpush.bf16.msra.mxu0 0
    %525 = vmatpush.bf16.msra.mxu0 0
    %526 = vmatpush.bf16.msra.mxu0 0
    %527 = vmatpush.bf16.msra.mxu0 0
    %528 = vmatpush.bf16.msra.mxu0 0
    %529 = vmatpush.bf16.msra.mxu0 %v387
    %530 = vmatpush.bf16.msra.mxu0 %v355
    %531 = vmatmul.bf16.gmra.mxu0 %v482
    %v532 = vpop.f32.mrf.mxu0
    %v533 = vadd.f32 %v99, %v532
    %v534 = vpop.f32.mrf.mxu0
    %535 = vdwg.mxu0
    %536 = vmatpush.bf16.msra.mxu0 0
    %537 = vmatpush.bf16.msra.mxu0 0
    %538 = vmatpush.bf16.msra.mxu0 0
    %539 = vmatpush.bf16.msra.mxu0 0
    %540 = vmatpush.bf16.msra.mxu0 0
    %541 = vmatpush.bf16.msra.mxu0 0
    %542 = vmatpush.bf16.msra.mxu0 %v388
    %543 = vmatpush.bf16.msra.mxu0 %v356
    %544 = vmatmul.bf16.gmra.mxu0 %v482
    %v545 = vpop.f32.mrf.mxu0
    %v546 = vadd.f32 %v100, %v545
    %v547 = vpop.f32.mrf.mxu0
    %548 = vdwg.mxu0
    %549 = vmatpush.bf16.msra.mxu0 0
    %550 = vmatpush.bf16.msra.mxu0 0
    %551 = vmatpush.bf16.msra.mxu0 0
    %552 = vmatpush.bf16.msra.mxu0 0
    %553 = vmatpush.bf16.msra.mxu0 0
    %554 = vmatpush.bf16.msra.mxu0 0
    %555 = vmatpush.bf16.msra.mxu0 %v389
    %556 = vmatpush.bf16.msra.mxu0 %v357
    %557 = vmatmul.bf16.gmra.mxu0 %v482
    %v558 = vpop.f32.mrf.mxu0
    %v559 = vadd.f32 %v101, %v558
    %v560 = vpop.f32.mrf.mxu0
    %561 = vdwg.mxu0
    %562 = vmatpush.bf16.msra.mxu0 0
    %563 = vmatpush.bf16.msra.mxu0 0
    %564 = vmatpush.bf16.msra.mxu0 0
    %565 = vmatpush.bf16.msra.mxu0 0
    %566 = vmatpush.bf16.msra.mxu0 0
    %567 = vmatpush.bf16.msra.mxu0 0
    %568 = vmatpush.bf16.msra.mxu0 %v390
    %569 = vmatpush.bf16.msra.mxu0 %v358
    %570 = vmatmul.bf16.gmra.mxu0 %v482
    %v571 = vpop.f32.mrf.mxu0
    %v572 = vadd.f32 %v102, %v571
    %v573 = vpop.f32.mrf.mxu0
    %574 = vdwg.mxu0
    %575 = vmatpush.bf16.msra.mxu0 0
    %576 = vmatpush.bf16.msra.mxu0 0
    %577 = vmatpush.bf16.msra.mxu0 0
    %578 = vmatpush.bf16.msra.mxu0 0
    %579 = vmatpush.bf16.msra.mxu0 0
    %580 = vmatpush.bf16.msra.mxu0 0
    %581 = vmatpush.bf16.msra.mxu0 %v391
    %582 = vmatpush.bf16.msra.mxu0 %v359
    %583 = vmatmul.bf16.gmra.mxu0 %v482
    %v584 = vpop.f32.mrf.mxu0
    %v585 = vadd.f32 %v103, %v584
    %v586 = vpop.f32.mrf.mxu0
    %587 = vdwg.mxu0
    %588 = vmatpush.bf16.msra.mxu0 0
    %589 = vmatpush.bf16.msra.mxu0 0
    %590 = vmatpush.bf16.msra.mxu0 0
    %591 = vmatpush.bf16.msra.mxu0 0
    %592 = vmatpush.bf16.msra.mxu0 0
    %593 = vmatpush.bf16.msra.mxu0 0
    %594 = vmatpush.bf16.msra.mxu0 %v392
    %595 = vmatpush.bf16.msra.mxu0 %v360
    %596 = vmatmul.bf16.gmra.mxu0 %v482
    %v597 = vpop.f32.mrf.mxu0
    %v598 = vadd.f32 %v104, %v597
    %v599 = vpop.f32.mrf.mxu0
    %600 = vdwg.mxu0
    %601 = vmatpush.bf16.msra.mxu0 0
    %602 = vmatpush.bf16.msra.mxu0 0
    %603 = vmatpush.bf16.msra.mxu0 0
    %604 = vmatpush.bf16.msra.mxu0 0
    %605 = vmatpush.bf16.msra.mxu0 0
    %606 = vmatpush.bf16.msra.mxu0 0
    %607 = vmatpush.bf16.msra.mxu0 %v393
    %608 = vmatpush.bf16.msra.mxu0 %v361
    %609 = vmatmul.bf16.gmra.mxu0 %v482
    %v610 = vpop.f32.mrf.mxu0
    %v611 = vadd.f32 %v105, %v610
    %v612 = vpop.f32.mrf.mxu0
    %613 = vdwg.mxu0
    %614 = vmatpush.bf16.msra.mxu0 0
    %615 = vmatpush.bf16.msra.mxu0 0
    %616 = vmatpush.bf16.msra.mxu0 0
    %617 = vmatpush.bf16.msra.mxu0 0
    %618 = vmatpush.bf16.msra.mxu0 0
    %619 = vmatpush.bf16.msra.mxu0 0
    %620 = vmatpush.bf16.msra.mxu0 %v394
    %621 = vmatpush.bf16.msra.mxu0 %v362
    %622 = vmatmul.bf16.gmra.mxu0 %v482
    %v623 = vpop.f32.mrf.mxu0
    %v624 = vadd.f32 %v106, %v623
    %v625 = vpop.f32.mrf.mxu0
    %626 = vdwg.mxu0
    %627 = vmatpush.bf16.msra.mxu0 0
    %628 = vmatpush.bf16.msra.mxu0 0
    %629 = vmatpush.bf16.msra.mxu0 0
    %630 = vmatpush.bf16.msra.mxu0 0
    %631 = vmatpush.bf16.msra.mxu0 0
    %632 = vmatpush.bf16.msra.mxu0 0
    %633 = vmatpush.bf16.msra.mxu0 %v395
    %634 = vmatpush.bf16.msra.mxu0 %v363
    %635 = vmatmul.bf16.gmra.mxu0 %v482
    %v636 = vpop.f32.mrf.mxu0
    %v637 = vadd.f32 %v107, %v636
    %v638 = vpop.f32.mrf.mxu0
    %639 = vdwg.mxu0
    %640 = vmatpush.bf16.msra.mxu0 0
    %641 = vmatpush.bf16.msra.mxu0 0
    %642 = vmatpush.bf16.msra.mxu0 0
    %643 = vmatpush.bf16.msra.mxu0 0
    %644 = vmatpush.bf16.msra.mxu0 0
    %645 = vmatpush.bf16.msra.mxu0 0
    %646 = vmatpush.bf16.msra.mxu0 %v396
    %647 = vmatpush.bf16.msra.mxu0 %v364
    %648 = vmatmul.bf16.gmra.mxu0 %v482
    %v649 = vpop.f32.mrf.mxu0
    %v650 = vadd.f32 %v108, %v649
    %v651 = vpop.f32.mrf.mxu0
    %652 = vdwg.mxu0
    %653 = vmatpush.bf16.msra.mxu0 0
    %654 = vmatpush.bf16.msra.mxu0 0
    %655 = vmatpush.bf16.msra.mxu0 0
    %656 = vmatpush.bf16.msra.mxu0 0
    %657 = vmatpush.bf16.msra.mxu0 0
    %658 = vmatpush.bf16.msra.mxu0 0
    %659 = vmatpush.bf16.msra.mxu0 %v397
    %660 = vmatpush.bf16.msra.mxu0 %v365
    %661 = vmatmul.bf16.gmra.mxu0 %v482
    %v662 = vpop.f32.mrf.mxu0
    %v663 = vadd.f32 %v109, %v662
    %v664 = vpop.f32.mrf.mxu0
    %665 = vdwg.mxu0
    %666 = vmatpush.bf16.msra.mxu0 0
    %667 = vmatpush.bf16.msra.mxu0 0
    %668 = vmatpush.bf16.msra.mxu0 0
    %669 = vmatpush.bf16.msra.mxu0 0
    %670 = vmatpush.bf16.msra.mxu0 0
    %671 = vmatpush.bf16.msra.mxu0 0
    %672 = vmatpush.bf16.msra.mxu0 %v398
    %673 = vmatpush.bf16.msra.mxu0 %v366
    %674 = vmatmul.bf16.gmra.mxu0 %v482
    %v675 = vpop.f32.mrf.mxu0
    %v676 = vadd.f32 %v110, %v675
    %v677 = vpop.f32.mrf.mxu0
    %678 = vdwg.mxu0
    %679 = vmatpush.bf16.msra.mxu0 0
    %680 = vmatpush.bf16.msra.mxu0 0
    %681 = vmatpush.bf16.msra.mxu0 0
    %682 = vmatpush.bf16.msra.mxu0 0
    %683 = vmatpush.bf16.msra.mxu0 0
    %684 = vmatpush.bf16.msra.mxu0 0
    %685 = vmatpush.bf16.msra.mxu0 %v399
    %686 = vmatpush.bf16.msra.mxu0 %v367
    %687 = vmatmul.bf16.gmra.mxu0 %v482
    %v688 = vpop.f32.mrf.mxu0
    %v689 = vadd.f32 %v111, %v688
    %v690 = vpop.f32.mrf.mxu0
    %691 = vdwg.mxu0
    %692 = vmatpush.bf16.msra.mxu0 0
    %693 = vmatpush.bf16.msra.mxu0 0
    %694 = vmatpush.bf16.msra.mxu0 0
    %695 = vmatpush.bf16.msra.mxu0 0
    %696 = vmatpush.bf16.msra.mxu0 0
    %697 = vmatpush.bf16.msra.mxu0 0
    %698 = vmatpush.bf16.msra.mxu0 %v400
    %699 = vmatpush.bf16.msra.mxu0 %v368
    %700 = vmatmul.bf16.gmra.mxu0 %v482
    %v701 = vpop.f32.mrf.mxu0
    %v702 = vadd.f32 %v112, %v701
    %v703 = vpop.f32.mrf.mxu0
    %704 = vdwg.mxu0
    %705 = vmatpush.bf16.msra.mxu0 0
    %706 = vmatpush.bf16.msra.mxu0 0
    %707 = vmatpush.bf16.msra.mxu0 0
    %708 = vmatpush.bf16.msra.mxu0 0
    %709 = vmatpush.bf16.msra.mxu0 0
    %710 = vmatpush.bf16.msra.mxu0 0
    %711 = vmatpush.bf16.msra.mxu0 %v401
    %712 = vmatpush.bf16.msra.mxu0 %v369
    %713 = vmatmul.bf16.gmra.mxu0 %v482
    %v714 = vpop.f32.mrf.mxu0
    %v715 = vadd.f32 %v113, %v714
    %v716 = vpop.f32.mrf.mxu0
    %717 = vdwg.mxu0
    %718 = vmatpush.bf16.msra.mxu0 0
    %719 = vmatpush.bf16.msra.mxu0 0
    %720 = vmatpush.bf16.msra.mxu0 0
    %721 = vmatpush.bf16.msra.mxu0 0
    %722 = vmatpush.bf16.msra.mxu0 0
    %723 = vmatpush.bf16.msra.mxu0 0
    %724 = vmatpush.bf16.msra.mxu0 %v402
    %725 = vmatpush.bf16.msra.mxu0 %v370
    %726 = vmatmul.bf16.gmra.mxu0 %v482
    %v727 = vpop.f32.mrf.mxu0
    %v728 = vadd.f32 %v114, %v727
    %v729 = vpop.f32.mrf.mxu0
    %730 = vdwg.mxu0
    %731 = vmatpush.bf16.msra.mxu0 0
    %732 = vmatpush.bf16.msra.mxu0 0
    %733 = vmatpush.bf16.msra.mxu0 0
    %734 = vmatpush.bf16.msra.mxu0 0
    %735 = vmatpush.bf16.msra.mxu0 0
    %736 = vmatpush.bf16.msra.mxu0 0
    %737 = vmatpush.bf16.msra.mxu0 %v403
    %738 = vmatpush.bf16.msra.mxu0 %v371
    %739 = vmatmul.bf16.gmra.mxu0 %v482
    %v740 = vpop.f32.mrf.mxu0
    %v741 = vadd.f32 %v115, %v740
    %v742 = vpop.f32.mrf.mxu0
    %743 = vdwg.mxu0
    %744 = vmatpush.bf16.msra.mxu0 0
    %745 = vmatpush.bf16.msra.mxu0 0
    %746 = vmatpush.bf16.msra.mxu0 0
    %747 = vmatpush.bf16.msra.mxu0 0
    %748 = vmatpush.bf16.msra.mxu0 0
    %749 = vmatpush.bf16.msra.mxu0 0
    %750 = vmatpush.bf16.msra.mxu0 %v404
    %751 = vmatpush.bf16.msra.mxu0 %v372
    %752 = vmatmul.bf16.gmra.mxu0 %v482
    %v753 = vpop.f32.mrf.mxu0
    %v754 = vadd.f32 %v116, %v753
    %v755 = vpop.f32.mrf.mxu0
    %756 = vdwg.mxu0
    %757 = vmatpush.bf16.msra.mxu0 0
    %758 = vmatpush.bf16.msra.mxu0 0
    %759 = vmatpush.bf16.msra.mxu0 0
    %760 = vmatpush.bf16.msra.mxu0 0
    %761 = vmatpush.bf16.msra.mxu0 0
    %762 = vmatpush.bf16.msra.mxu0 0
    %763 = vmatpush.bf16.msra.mxu0 %v405
    %764 = vmatpush.bf16.msra.mxu0 %v373
    %765 = vmatmul.bf16.gmra.mxu0 %v482
    %v766 = vpop.f32.mrf.mxu0
    %v767 = vadd.f32 %v117, %v766
    %v768 = vpop.f32.mrf.mxu0
    %769 = vdwg.mxu0
    %770 = vmatpush.bf16.msra.mxu0 0
    %771 = vmatpush.bf16.msra.mxu0 0
    %772 = vmatpush.bf16.msra.mxu0 0
    %773 = vmatpush.bf16.msra.mxu0 0
    %774 = vmatpush.bf16.msra.mxu0 0
    %775 = vmatpush.bf16.msra.mxu0 0
    %776 = vmatpush.bf16.msra.mxu0 %v406
    %777 = vmatpush.bf16.msra.mxu0 %v374
    %778 = vmatmul.bf16.gmra.mxu0 %v482
    %v779 = vpop.f32.mrf.mxu0
    %v780 = vadd.f32 %v118, %v779
    %v781 = vpop.f32.mrf.mxu0
    %782 = vdwg.mxu0
    %783 = vmatpush.bf16.msra.mxu0 0
    %784 = vmatpush.bf16.msra.mxu0 0
    %785 = vmatpush.bf16.msra.mxu0 0
    %786 = vmatpush.bf16.msra.mxu0 0
    %787 = vmatpush.bf16.msra.mxu0 0
    %788 = vmatpush.bf16.msra.mxu0 0
    %789 = vmatpush.bf16.msra.mxu0 %v407
    %790 = vmatpush.bf16.msra.mxu0 %v375
    %791 = vmatmul.bf16.gmra.mxu0 %v482
    %v792 = vpop.f32.mrf.mxu0
    %v793 = vadd.f32 %v119, %v792
    %v794 = vpop.f32.mrf.mxu0
    %795 = vdwg.mxu0
    %796 = vmatpush.bf16.msra.mxu0 0
    %797 = vmatpush.bf16.msra.mxu0 0
    %798 = vmatpush.bf16.msra.mxu0 0
    %799 = vmatpush.bf16.msra.mxu0 0
    %800 = vmatpush.bf16.msra.mxu0 0
    %801 = vmatpush.bf16.msra.mxu0 0
    %802 = vmatpush.bf16.msra.mxu0 %v408
    %803 = vmatpush.bf16.msra.mxu0 %v376
    %804 = vmatmul.bf16.gmra.mxu0 %v482
    %v805 = vpop.f32.mrf.mxu0
    %v806 = vadd.f32 %v120, %v805
    %v807 = vpop.f32.mrf.mxu0
    %808 = vdwg.mxu0
    %809 = vmatpush.bf16.msra.mxu0 0
    %810 = vmatpush.bf16.msra.mxu0 0
    %811 = vmatpush.bf16.msra.mxu0 0
    %812 = vmatpush.bf16.msra.mxu0 0
    %813 = vmatpush.bf16.msra.mxu0 0
    %814 = vmatpush.bf16.msra.mxu0 0
    %815 = vmatpush.bf16.msra.mxu0 %v409
    %816 = vmatpush.bf16.msra.mxu0 %v377
    %817 = vmatmul.bf16.gmra.mxu0 %v482
    %v818 = vpop.f32.mrf.mxu0
    %v819 = vadd.f32 %v121, %v818
    %v820 = vpop.f32.mrf.mxu0
    %821 = vdwg.mxu0
    %822 = vmatpush.bf16.msra.mxu0 0
    %823 = vmatpush.bf16.msra.mxu0 0
    %824 = vmatpush.bf16.msra.mxu0 0
    %825 = vmatpush.bf16.msra.mxu0 0
    %826 = vmatpush.bf16.msra.mxu0 0
    %827 = vmatpush.bf16.msra.mxu0 0
    %828 = vmatpush.bf16.msra.mxu0 %v410
    %829 = vmatpush.bf16.msra.mxu0 %v378
    %830 = vmatmul.bf16.gmra.mxu0 %v482
    %v831 = vpop.f32.mrf.mxu0
    %v832 = vadd.f32 %v122, %v831
    %v833 = vpop.f32.mrf.mxu0
    %834 = vdwg.mxu0
    %835 = vmatpush.bf16.msra.mxu0 0
    %836 = vmatpush.bf16.msra.mxu0 0
    %837 = vmatpush.bf16.msra.mxu0 0
    %838 = vmatpush.bf16.msra.mxu0 0
    %839 = vmatpush.bf16.msra.mxu0 0
    %840 = vmatpush.bf16.msra.mxu0 0
    %841 = vmatpush.bf16.msra.mxu0 %v411
    %842 = vmatpush.bf16.msra.mxu0 %v379
    %843 = vmatmul.bf16.gmra.mxu0 %v482
    %v844 = vpop.f32.mrf.mxu0
    %v845 = vadd.f32 %v123, %v844
    %v846 = vpop.f32.mrf.mxu0
    %847 = vdwg.mxu0
    %848 = vmatpush.bf16.msra.mxu0 0
    %849 = vmatpush.bf16.msra.mxu0 0
    %850 = vmatpush.bf16.msra.mxu0 0
    %851 = vmatpush.bf16.msra.mxu0 0
    %852 = vmatpush.bf16.msra.mxu0 0
    %853 = vmatpush.bf16.msra.mxu0 0
    %854 = vmatpush.bf16.msra.mxu0 %v412
    %855 = vmatpush.bf16.msra.mxu0 %v380
    %856 = vmatmul.bf16.gmra.mxu0 %v482
    %v857 = vpop.f32.mrf.mxu0
    %v858 = vadd.f32 %v124, %v857
    %v859 = vpop.f32.mrf.mxu0
    %860 = vdwg.mxu0
    %861 = vmatpush.bf16.msra.mxu0 0
    %862 = vmatpush.bf16.msra.mxu0 0
    %863 = vmatpush.bf16.msra.mxu0 0
    %864 = vmatpush.bf16.msra.mxu0 0
    %865 = vmatpush.bf16.msra.mxu0 0
    %866 = vmatpush.bf16.msra.mxu0 0
    %867 = vmatpush.bf16.msra.mxu0 %v413
    %868 = vmatpush.bf16.msra.mxu0 %v381
    %869 = vmatmul.bf16.gmra.mxu0 %v482
    %v870 = vpop.f32.mrf.mxu0
    %v871 = vadd.f32 %v125, %v870
    %v872 = vpop.f32.mrf.mxu0
    %873 = vdwg.mxu0
    %874 = vmatpush.bf16.msra.mxu0 0
    %875 = vmatpush.bf16.msra.mxu0 0
    %876 = vmatpush.bf16.msra.mxu0 0
    %877 = vmatpush.bf16.msra.mxu0 0
    %878 = vmatpush.bf16.msra.mxu0 0
    %879 = vmatpush.bf16.msra.mxu0 0
    %880 = vmatpush.bf16.msra.mxu0 %v414
    %881 = vmatpush.bf16.msra.mxu0 %v382
    %882 = vmatmul.bf16.gmra.mxu0 %v482
    %v883 = vpop.f32.mrf.mxu0
    %v884 = vadd.f32 %v126, %v883
    %v885 = vpop.f32.mrf.mxu0
    %886 = vdwg.mxu0
    %887 = vmatpush.bf16.msra.mxu0 0
    %888 = vmatpush.bf16.msra.mxu0 0
    %889 = vmatpush.bf16.msra.mxu0 0
    %890 = vmatpush.bf16.msra.mxu0 0
    %891 = vmatpush.bf16.msra.mxu0 0
    %892 = vmatpush.bf16.msra.mxu0 0
    %893 = vmatpush.bf16.msra.mxu0 %v415
    %894 = vmatpush.bf16.msra.mxu0 %v383
    %895 = vmatmul.bf16.gmra.mxu0 %v482
    %v896 = vpop.f32.mrf.mxu0
    %v897 = vadd.f32 %v127, %v896
    %v898 = vpop.f32.mrf.mxu0
    %899 = vdwg.mxu0
    %v900 = vmax.f32 %v494, 0.0
    %v901 = vmax.f32 %v507, 0.0
    %v902 = vmax.f32 %v520, 0.0
    %v903 = vmax.f32 %v533, 0.0
    %v904 = vmax.f32 %v546, 0.0
    %v905 = vmax.f32 %v559, 0.0
    %v906 = vmax.f32 %v572, 0.0
    %v907 = vmax.f32 %v585, 0.0
    %v908 = vmax.f32 %v598, 0.0
    %v909 = vmax.f32 %v611, 0.0
    %v910 = vmax.f32 %v624, 0.0
    %v911 = vmax.f32 %v637, 0.0
    %v912 = vmax.f32 %v650, 0.0
    %v913 = vmax.f32 %v663, 0.0
    %v914 = vmax.f32 %v676, 0.0
    %v915 = vmax.f32 %v689, 0.0
    %v916 = vmax.f32 %v702, 0.0
    %v917 = vmax.f32 %v715, 0.0
    %v918 = vmax.f32 %v728, 0.0
    %v919 = vmax.f32 %v741, 0.0
    %v920 = vmax.f32 %v754, 0.0
    %v921 = vmax.f32 %v767, 0.0
    %v922 = vmax.f32 %v780, 0.0
    %v923 = vmax.f32 %v793, 0.0
    %v924 = vmax.f32 %v806, 0.0
    %v925 = vmax.f32 %v819, 0.0
    %v926 = vmax.f32 %v832, 0.0
    %v927 = vmax.f32 %v845, 0.0
    %v928 = vmax.f32 %v858, 0.0
    %v929 = vmax.f32 %v871, 0.0
    %v930 = vmax.f32 %v884, 0.0
    %v931 = vmax.f32 %v897, 0.0
    %v932 = vpack.c.bf16 %v900, %v900
    %v933 = vpack.c.bf16 %v901, %v901
    %v934 = vpack.c.bf16 %v902, %v902
    %v935 = vpack.c.bf16 %v903, %v903
    %v936 = vpack.c.bf16 %v904, %v904
    %v937 = vpack.c.bf16 %v905, %v905
    %v938 = vpack.c.bf16 %v906, %v906
    %v939 = vpack.c.bf16 %v907, %v907
    %v940 = vpack.c.bf16 %v908, %v908
    %v941 = vpack.c.bf16 %v909, %v909
    %v942 = vpack.c.bf16 %v910, %v910
    %v943 = vpack.c.bf16 %v911, %v911
    %v944 = vpack.c.bf16 %v912, %v912
    %v945 = vpack.c.bf16 %v913, %v913
    %v946 = vpack.c.bf16 %v914, %v914
    %v947 = vpack.c.bf16 %v915, %v915
    %v948 = vpack.c.bf16 %v916, %v916
    %v949 = vpack.c.bf16 %v917, %v917
    %v950 = vpack.c.bf16 %v918, %v918
    %v951 = vpack.c.bf16 %v919, %v919
    %v952 = vpack.c.bf16 %v920, %v920
    %v953 = vpack.c.bf16 %v921, %v921
    %v954 = vpack.c.bf16 %v922, %v922
    %v955 = vpack.c.bf16 %v923, %v923
    %v956 = vpack.c.bf16 %v924, %v924
    %v957 = vpack.c.bf16 %v925, %v925
    %v958 = vpack.c.bf16 %v926, %v926
    %v959 = vpack.c.bf16 %v927, %v927
    %v960 = vpack.c.bf16 %v928, %v928
    %v961 = vpack.c.bf16 %v929, %v929
    %v962 = vpack.c.bf16 %v930, %v930
    %v963 = vpack.c.bf16 %v931, %v931
    %v964 = vld [vmem:[%s3] sm:$0xf]
    %v965 = vld [vmem:[%s3 + $0x4] sm:$0xf]
    %v966 = vld [vmem:[%s3 + $0x8] sm:$0xf]
    %v967 = vld [vmem:[%s3 + $0xc] sm:$0xf]
    %v968 = vld [vmem:[%s3 + $0x10] sm:$0xf]
    %v969 = vld [vmem:[%s3 + $0x14] sm:$0xf]
    %v970 = vld [vmem:[%s3 + $0x18] sm:$0xf]
    %v971 = vld [vmem:[%s3 + $0x1c] sm:$0xf]
    %v972 = vld [vmem:[%s3 + $0x20] sm:$0xf]
    %v973 = vld [vmem:[%s3 + $0x24] sm:$0xf]
    %v974 = vld [vmem:[%s3 + $0x28] sm:$0xf]
    %v975 = vld [vmem:[%s3 + $0x2c] sm:$0xf]
    %v976 = vld [vmem:[%s3 + $0x30] sm:$0xf]
    %v977 = vld [vmem:[%s3 + $0x34] sm:$0xf]
    %v978 = vld [vmem:[%s3 + $0x38] sm:$0xf]
    %v979 = vld [vmem:[%s3 + $0x3c] sm:$0xf]
    %v980 = vld [vmem:[%s3 + $0x40] sm:$0xf]
    %v981 = vld [vmem:[%s3 + $0x44] sm:$0xf]
    %v982 = vld [vmem:[%s3 + $0x48] sm:$0xf]
    %v983 = vld [vmem:[%s3 + $0x4c] sm:$0xf]
    %v984 = vld [vmem:[%s3 + $0x50] sm:$0xf]
    %v985 = vld [vmem:[%s3 + $0x54] sm:$0xf]
    %v986 = vld [vmem:[%s3 + $0x58] sm:$0xf]
    %v987 = vld [vmem:[%s3 + $0x5c] sm:$0xf]
    %v988 = vld [vmem:[%s3 + $0x60] sm:$0xf]
    %v989 = vld [vmem:[%s3 + $0x64] sm:$0xf]
    %v990 = vld [vmem:[%s3 + $0x68] sm:$0xf]
    %v991 = vld [vmem:[%s3 + $0x6c] sm:$0xf]
    %v992 = vld [vmem:[%s3 + $0x70] sm:$0xf]
    %v993 = vld [vmem:[%s3 + $0x74] sm:$0xf]
    %v994 = vld [vmem:[%s3 + $0x78] sm:$0xf]
    %v995 = vld [vmem:[%s3 + $0x7c] sm:$0xf]
    %v996 = vld [vmem:[%s3 + $0x80] sm:$0xf]
    %v997 = vld [vmem:[%s3 + $0x84] sm:$0xf]
    %v998 = vld [vmem:[%s3 + $0x88] sm:$0xf]
    %v999 = vld [vmem:[%s3 + $0x8c] sm:$0xf]
    %v1000 = vld [vmem:[%s3 + $0x90] sm:$0xf]
    %v1001 = vld [vmem:[%s3 + $0x94] sm:$0xf]
    %v1002 = vld [vmem:[%s3 + $0x98] sm:$0xf]
    %v1003 = vld [vmem:[%s3 + $0x9c] sm:$0xf]
    %v1004 = vld [vmem:[%s3 + $0xa0] sm:$0xf]
    %v1005 = vld [vmem:[%s3 + $0xa4] sm:$0xf]
    %v1006 = vld [vmem:[%s3 + $0xa8] sm:$0xf]
    %v1007 = vld [vmem:[%s3 + $0xac] sm:$0xf]
    %v1008 = vld [vmem:[%s3 + $0xb0] sm:$0xf]
    %v1009 = vld [vmem:[%s3 + $0xb4] sm:$0xf]
    %v1010 = vld [vmem:[%s3 + $0xb8] sm:$0xf]
    %v1011 = vld [vmem:[%s3 + $0xbc] sm:$0xf]
    %v1012 = vld [vmem:[%s3 + $0xc0] sm:$0xf]
    %v1013 = vld [vmem:[%s3 + $0xc4] sm:$0xf]
    %v1014 = vld [vmem:[%s3 + $0xc8] sm:$0xf]
    %v1015 = vld [vmem:[%s3 + $0xcc] sm:$0xf]
    %v1016 = vld [vmem:[%s3 + $0xd0] sm:$0xf]
    %v1017 = vld [vmem:[%s3 + $0xd4] sm:$0xf]
    %v1018 = vld [vmem:[%s3 + $0xd8] sm:$0xf]
    %v1019 = vld [vmem:[%s3 + $0xdc] sm:$0xf]
    %v1020 = vld [vmem:[%s3 + $0xe0] sm:$0xf]
    %v1021 = vld [vmem:[%s3 + $0xe4] sm:$0xf]
    %v1022 = vld [vmem:[%s3 + $0xe8] sm:$0xf]
    %v1023 = vld [vmem:[%s3 + $0xec] sm:$0xf]
    %v1024 = vld [vmem:[%s3 + $0xf0] sm:$0xf]
    %v1025 = vld [vmem:[%s3 + $0xf4] sm:$0xf]
    %v1026 = vld [vmem:[%s3 + $0xf8] sm:$0xf]
    %v1027 = vld [vmem:[%s3 + $0xfc] sm:$0xf]
    %v1028 = vld [vmem:[%s3 + $0x100] sm:$0xf]
    %v1029 = vld [vmem:[%s3 + $0x104] sm:$0xf]
    %v1030 = vld [vmem:[%s3 + $0x108] sm:$0xf]
    %v1031 = vld [vmem:[%s3 + $0x10c] sm:$0xf]
    %v1032 = vld [vmem:[%s3 + $0x110] sm:$0xf]
    %v1033 = vld [vmem:[%s3 + $0x114] sm:$0xf]
    %v1034 = vld [vmem:[%s3 + $0x118] sm:$0xf]
    %v1035 = vld [vmem:[%s3 + $0x11c] sm:$0xf]
    %v1036 = vld [vmem:[%s3 + $0x120] sm:$0xf]
    %v1037 = vld [vmem:[%s3 + $0x124] sm:$0xf]
    %v1038 = vld [vmem:[%s3 + $0x128] sm:$0xf]
    %v1039 = vld [vmem:[%s3 + $0x12c] sm:$0xf]
    %v1040 = vld [vmem:[%s3 + $0x130] sm:$0xf]
    %v1041 = vld [vmem:[%s3 + $0x134] sm:$0xf]
    %v1042 = vld [vmem:[%s3 + $0x138] sm:$0xf]
    %v1043 = vld [vmem:[%s3 + $0x13c] sm:$0xf]
    %v1044 = vld [vmem:[%s3 + $0x140] sm:$0xf]
    %v1045 = vld [vmem:[%s3 + $0x144] sm:$0xf]
    %v1046 = vld [vmem:[%s3 + $0x148] sm:$0xf]
    %v1047 = vld [vmem:[%s3 + $0x14c] sm:$0xf]
    %v1048 = vld [vmem:[%s3 + $0x150] sm:$0xf]
    %v1049 = vld [vmem:[%s3 + $0x154] sm:$0xf]
    %v1050 = vld [vmem:[%s3 + $0x158] sm:$0xf]
    %v1051 = vld [vmem:[%s3 + $0x15c] sm:$0xf]
    %v1052 = vld [vmem:[%s3 + $0x160] sm:$0xf]
    %v1053 = vld [vmem:[%s3 + $0x164] sm:$0xf]
    %v1054 = vld [vmem:[%s3 + $0x168] sm:$0xf]
    %v1055 = vld [vmem:[%s3 + $0x16c] sm:$0xf]
    %v1056 = vld [vmem:[%s3 + $0x170] sm:$0xf]
    %v1057 = vld [vmem:[%s3 + $0x174] sm:$0xf]
    %v1058 = vld [vmem:[%s3 + $0x178] sm:$0xf]
    %v1059 = vld [vmem:[%s3 + $0x17c] sm:$0xf]
    %v1060 = vld [vmem:[%s3 + $0x180] sm:$0xf]
    %v1061 = vld [vmem:[%s3 + $0x184] sm:$0xf]
    %v1062 = vld [vmem:[%s3 + $0x188] sm:$0xf]
    %v1063 = vld [vmem:[%s3 + $0x18c] sm:$0xf]
    %v1064 = vld [vmem:[%s3 + $0x190] sm:$0xf]
    %v1065 = vld [vmem:[%s3 + $0x194] sm:$0xf]
    %v1066 = vld [vmem:[%s3 + $0x198] sm:$0xf]
    %v1067 = vld [vmem:[%s3 + $0x19c] sm:$0xf]
    %v1068 = vld [vmem:[%s3 + $0x1a0] sm:$0xf]
    %v1069 = vld [vmem:[%s3 + $0x1a4] sm:$0xf]
    %v1070 = vld [vmem:[%s3 + $0x1a8] sm:$0xf]
    %v1071 = vld [vmem:[%s3 + $0x1ac] sm:$0xf]
    %v1072 = vld [vmem:[%s3 + $0x1b0] sm:$0xf]
    %v1073 = vld [vmem:[%s3 + $0x1b4] sm:$0xf]
    %v1074 = vld [vmem:[%s3 + $0x1b8] sm:$0xf]
    %v1075 = vld [vmem:[%s3 + $0x1bc] sm:$0xf]
    %v1076 = vld [vmem:[%s3 + $0x1c0] sm:$0xf]
    %v1077 = vld [vmem:[%s3 + $0x1c4] sm:$0xf]
    %v1078 = vld [vmem:[%s3 + $0x1c8] sm:$0xf]
    %v1079 = vld [vmem:[%s3 + $0x1cc] sm:$0xf]
    %v1080 = vld [vmem:[%s3 + $0x1d0] sm:$0xf]
    %v1081 = vld [vmem:[%s3 + $0x1d4] sm:$0xf]
    %v1082 = vld [vmem:[%s3 + $0x1d8] sm:$0xf]
    %v1083 = vld [vmem:[%s3 + $0x1dc] sm:$0xf]
    %v1084 = vld [vmem:[%s3 + $0x1e0] sm:$0xf]
    %v1085 = vld [vmem:[%s3 + $0x1e4] sm:$0xf]
    %v1086 = vld [vmem:[%s3 + $0x1e8] sm:$0xf]
    %v1087 = vld [vmem:[%s3 + $0x1ec] sm:$0xf]
    %v1088 = vld [vmem:[%s3 + $0x1f0] sm:$0xf]
    %v1089 = vld [vmem:[%s3 + $0x1f4] sm:$0xf]
    %v1090 = vld [vmem:[%s3 + $0x1f8] sm:$0xf]
    %v1091 = vld [vmem:[%s3 + $0x1fc] sm:$0xf]
    %v1092 = vld [vmem:[%s3 + $0x200] sm:$0xf]
    %v1093 = vld [vmem:[%s3 + $0x204] sm:$0xf]
    %v1094 = vld [vmem:[%s3 + $0x208] sm:$0xf]
    %v1095 = vld [vmem:[%s3 + $0x20c] sm:$0xf]
    %v1096 = vld [vmem:[%s3 + $0x210] sm:$0xf]
    %v1097 = vld [vmem:[%s3 + $0x214] sm:$0xf]
    %v1098 = vld [vmem:[%s3 + $0x218] sm:$0xf]
    %v1099 = vld [vmem:[%s3 + $0x21c] sm:$0xf]
    %v1100 = vld [vmem:[%s3 + $0x220] sm:$0xf]
    %v1101 = vld [vmem:[%s3 + $0x224] sm:$0xf]
    %v1102 = vld [vmem:[%s3 + $0x228] sm:$0xf]
    %v1103 = vld [vmem:[%s3 + $0x22c] sm:$0xf]
    %v1104 = vld [vmem:[%s3 + $0x230] sm:$0xf]
    %v1105 = vld [vmem:[%s3 + $0x234] sm:$0xf]
    %v1106 = vld [vmem:[%s3 + $0x238] sm:$0xf]
    %v1107 = vld [vmem:[%s3 + $0x23c] sm:$0xf]
    %v1108 = vld [vmem:[%s3 + $0x240] sm:$0xf]
    %v1109 = vld [vmem:[%s3 + $0x244] sm:$0xf]
    %v1110 = vld [vmem:[%s3 + $0x248] sm:$0xf]
    %v1111 = vld [vmem:[%s3 + $0x24c] sm:$0xf]
    %v1112 = vld [vmem:[%s3 + $0x250] sm:$0xf]
    %v1113 = vld [vmem:[%s3 + $0x254] sm:$0xf]
    %v1114 = vld [vmem:[%s3 + $0x258] sm:$0xf]
    %v1115 = vld [vmem:[%s3 + $0x25c] sm:$0xf]
    %v1116 = vld [vmem:[%s3 + $0x260] sm:$0xf]
    %v1117 = vld [vmem:[%s3 + $0x264] sm:$0xf]
    %v1118 = vld [vmem:[%s3 + $0x268] sm:$0xf]
    %v1119 = vld [vmem:[%s3 + $0x26c] sm:$0xf]
    %v1120 = vld [vmem:[%s3 + $0x270] sm:$0xf]
    %v1121 = vld [vmem:[%s3 + $0x274] sm:$0xf]
    %v1122 = vld [vmem:[%s3 + $0x278] sm:$0xf]
    %v1123 = vld [vmem:[%s3 + $0x27c] sm:$0xf]
    %v1124 = vld [vmem:[%s3 + $0x280] sm:$0xf]
    %v1125 = vld [vmem:[%s3 + $0x284] sm:$0xf]
    %v1126 = vld [vmem:[%s3 + $0x288] sm:$0xf]
    %v1127 = vld [vmem:[%s3 + $0x28c] sm:$0xf]
    %v1128 = vld [vmem:[%s3 + $0x290] sm:$0xf]
    %v1129 = vld [vmem:[%s3 + $0x294] sm:$0xf]
    %v1130 = vld [vmem:[%s3 + $0x298] sm:$0xf]
    %v1131 = vld [vmem:[%s3 + $0x29c] sm:$0xf]
    %v1132 = vld [vmem:[%s3 + $0x2a0] sm:$0xf]
    %v1133 = vld [vmem:[%s3 + $0x2a4] sm:$0xf]
    %v1134 = vld [vmem:[%s3 + $0x2a8] sm:$0xf]
    %v1135 = vld [vmem:[%s3 + $0x2ac] sm:$0xf]
    %v1136 = vld [vmem:[%s3 + $0x2b0] sm:$0xf]
    %v1137 = vld [vmem:[%s3 + $0x2b4] sm:$0xf]
    %v1138 = vld [vmem:[%s3 + $0x2b8] sm:$0xf]
    %v1139 = vld [vmem:[%s3 + $0x2bc] sm:$0xf]
    %v1140 = vld [vmem:[%s3 + $0x2c0] sm:$0xf]
    %v1141 = vld [vmem:[%s3 + $0x2c4] sm:$0xf]
    %v1142 = vld [vmem:[%s3 + $0x2c8] sm:$0xf]
    %v1143 = vld [vmem:[%s3 + $0x2cc] sm:$0xf]
    %v1144 = vld [vmem:[%s3 + $0x2d0] sm:$0xf]
    %v1145 = vld [vmem:[%s3 + $0x2d4] sm:$0xf]
    %v1146 = vld [vmem:[%s3 + $0x2d8] sm:$0xf]
    %v1147 = vld [vmem:[%s3 + $0x2dc] sm:$0xf]
    %v1148 = vld [vmem:[%s3 + $0x2e0] sm:$0xf]
    %v1149 = vld [vmem:[%s3 + $0x2e4] sm:$0xf]
    %v1150 = vld [vmem:[%s3 + $0x2e8] sm:$0xf]
    %v1151 = vld [vmem:[%s3 + $0x2ec] sm:$0xf]
    %v1152 = vld [vmem:[%s3 + $0x2f0] sm:$0xf]
    %v1153 = vld [vmem:[%s3 + $0x2f4] sm:$0xf]
    %v1154 = vld [vmem:[%s3 + $0x2f8] sm:$0xf]
    %v1155 = vld [vmem:[%s3 + $0x2fc] sm:$0xf]
    %v1156 = vld [vmem:[%s3 + $0x300] sm:$0xf]
    %v1157 = vld [vmem:[%s3 + $0x304] sm:$0xf]
    %v1158 = vld [vmem:[%s3 + $0x308] sm:$0xf]
    %v1159 = vld [vmem:[%s3 + $0x30c] sm:$0xf]
    %v1160 = vld [vmem:[%s3 + $0x310] sm:$0xf]
    %v1161 = vld [vmem:[%s3 + $0x314] sm:$0xf]
    %v1162 = vld [vmem:[%s3 + $0x318] sm:$0xf]
    %v1163 = vld [vmem:[%s3 + $0x31c] sm:$0xf]
    %v1164 = vld [vmem:[%s3 + $0x320] sm:$0xf]
    %v1165 = vld [vmem:[%s3 + $0x324] sm:$0xf]
    %v1166 = vld [vmem:[%s3 + $0x328] sm:$0xf]
    %v1167 = vld [vmem:[%s3 + $0x32c] sm:$0xf]
    %v1168 = vld [vmem:[%s3 + $0x330] sm:$0xf]
    %v1169 = vld [vmem:[%s3 + $0x334] sm:$0xf]
    %v1170 = vld [vmem:[%s3 + $0x338] sm:$0xf]
    %v1171 = vld [vmem:[%s3 + $0x33c] sm:$0xf]
    %v1172 = vld [vmem:[%s3 + $0x340] sm:$0xf]
    %v1173 = vld [vmem:[%s3 + $0x344] sm:$0xf]
    %v1174 = vld [vmem:[%s3 + $0x348] sm:$0xf]
    %v1175 = vld [vmem:[%s3 + $0x34c] sm:$0xf]
    %v1176 = vld [vmem:[%s3 + $0x350] sm:$0xf]
    %v1177 = vld [vmem:[%s3 + $0x354] sm:$0xf]
    %v1178 = vld [vmem:[%s3 + $0x358] sm:$0xf]
    %v1179 = vld [vmem:[%s3 + $0x35c] sm:$0xf]
    %v1180 = vld [vmem:[%s3 + $0x360] sm:$0xf]
    %v1181 = vld [vmem:[%s3 + $0x364] sm:$0xf]
    %v1182 = vld [vmem:[%s3 + $0x368] sm:$0xf]
    %v1183 = vld [vmem:[%s3 + $0x36c] sm:$0xf]
    %v1184 = vld [vmem:[%s3 + $0x370] sm:$0xf]
    %v1185 = vld [vmem:[%s3 + $0x374] sm:$0xf]
    %v1186 = vld [vmem:[%s3 + $0x378] sm:$0xf]
    %v1187 = vld [vmem:[%s3 + $0x37c] sm:$0xf]
    %v1188 = vld [vmem:[%s3 + $0x380] sm:$0xf]
    %v1189 = vld [vmem:[%s3 + $0x384] sm:$0xf]
    %v1190 = vld [vmem:[%s3 + $0x388] sm:$0xf]
    %v1191 = vld [vmem:[%s3 + $0x38c] sm:$0xf]
    %v1192 = vld [vmem:[%s3 + $0x390] sm:$0xf]
    %v1193 = vld [vmem:[%s3 + $0x394] sm:$0xf]
    %v1194 = vld [vmem:[%s3 + $0x398] sm:$0xf]
    %v1195 = vld [vmem:[%s3 + $0x39c] sm:$0xf]
    %v1196 = vld [vmem:[%s3 + $0x3a0] sm:$0xf]
    %v1197 = vld [vmem:[%s3 + $0x3a4] sm:$0xf]
    %v1198 = vld [vmem:[%s3 + $0x3a8] sm:$0xf]
    %v1199 = vld [vmem:[%s3 + $0x3ac] sm:$0xf]
    %v1200 = vld [vmem:[%s3 + $0x3b0] sm:$0xf]
    %v1201 = vld [vmem:[%s3 + $0x3b4] sm:$0xf]
    %v1202 = vld [vmem:[%s3 + $0x3b8] sm:$0xf]
    %v1203 = vld [vmem:[%s3 + $0x3bc] sm:$0xf]
    %v1204 = vld [vmem:[%s3 + $0x3c0] sm:$0xf]
    %v1205 = vld [vmem:[%s3 + $0x3c4] sm:$0xf]
    %v1206 = vld [vmem:[%s3 + $0x3c8] sm:$0xf]
    %v1207 = vld [vmem:[%s3 + $0x3cc] sm:$0xf]
    %v1208 = vld [vmem:[%s3 + $0x3d0] sm:$0xf]
    %v1209 = vld [vmem:[%s3 + $0x3d4] sm:$0xf]
    %v1210 = vld [vmem:[%s3 + $0x3d8] sm:$0xf]
    %v1211 = vld [vmem:[%s3 + $0x3dc] sm:$0xf]
    %v1212 = vld [vmem:[%s3 + $0x3e0] sm:$0xf]
    %v1213 = vld [vmem:[%s3 + $0x3e4] sm:$0xf]
    %v1214 = vld [vmem:[%s3 + $0x3e8] sm:$0xf]
    %v1215 = vld [vmem:[%s3 + $0x3ec] sm:$0xf]
    %v1216 = vld [vmem:[%s3 + $0x3f0] sm:$0xf]
    %v1217 = vld [vmem:[%s3 + $0x3f4] sm:$0xf]
    %v1218 = vld [vmem:[%s3 + $0x3f8] sm:$0xf]
    %v1219 = vld [vmem:[%s3 + $0x3fc] sm:$0xf]
    %v1220 = vld [vmem:[%s3 + $0x400] sm:$0xf]
    %v1221 = vld [vmem:[%s3 + $0x404] sm:$0xf]
    %v1222 = vld [vmem:[%s3 + $0x408] sm:$0xf]
    %v1223 = vld [vmem:[%s3 + $0x40c] sm:$0xf]
    %v1224 = vld [vmem:[%s3 + $0x410] sm:$0xf]
    %v1225 = vld [vmem:[%s3 + $0x414] sm:$0xf]
    %v1226 = vld [vmem:[%s3 + $0x418] sm:$0xf]
    %v1227 = vld [vmem:[%s3 + $0x41c] sm:$0xf]
    %v1228 = vld [vmem:[%s3 + $0x420] sm:$0xf]
    %v1229 = vld [vmem:[%s3 + $0x424] sm:$0xf]
    %v1230 = vld [vmem:[%s3 + $0x428] sm:$0xf]
    %v1231 = vld [vmem:[%s3 + $0x42c] sm:$0xf]
    %v1232 = vld [vmem:[%s3 + $0x430] sm:$0xf]
    %v1233 = vld [vmem:[%s3 + $0x434] sm:$0xf]
    %v1234 = vld [vmem:[%s3 + $0x438] sm:$0xf]
    %v1235 = vld [vmem:[%s3 + $0x43c] sm:$0xf]
    %v1236 = vld [vmem:[%s3 + $0x440] sm:$0xf]
    %v1237 = vld [vmem:[%s3 + $0x444] sm:$0xf]
    %v1238 = vld [vmem:[%s3 + $0x448] sm:$0xf]
    %v1239 = vld [vmem:[%s3 + $0x44c] sm:$0xf]
    %v1240 = vld [vmem:[%s3 + $0x450] sm:$0xf]
    %v1241 = vld [vmem:[%s3 + $0x454] sm:$0xf]
    %v1242 = vld [vmem:[%s3 + $0x458] sm:$0xf]
    %v1243 = vld [vmem:[%s3 + $0x45c] sm:$0xf]
    %v1244 = vld [vmem:[%s3 + $0x460] sm:$0xf]
    %v1245 = vld [vmem:[%s3 + $0x464] sm:$0xf]
    %v1246 = vld [vmem:[%s3 + $0x468] sm:$0xf]
    %v1247 = vld [vmem:[%s3 + $0x46c] sm:$0xf]
    %v1248 = vld [vmem:[%s3 + $0x470] sm:$0xf]
    %v1249 = vld [vmem:[%s3 + $0x474] sm:$0xf]
    %v1250 = vld [vmem:[%s3 + $0x478] sm:$0xf]
    %v1251 = vld [vmem:[%s3 + $0x47c] sm:$0xf]
    %v1252 = vld [vmem:[%s3 + $0x480] sm:$0xf]
    %v1253 = vld [vmem:[%s3 + $0x484] sm:$0xf]
    %v1254 = vld [vmem:[%s3 + $0x488] sm:$0xf]
    %v1255 = vld [vmem:[%s3 + $0x48c] sm:$0xf]
    %v1256 = vld [vmem:[%s3 + $0x490] sm:$0xf]
    %v1257 = vld [vmem:[%s3 + $0x494] sm:$0xf]
    %v1258 = vld [vmem:[%s3 + $0x498] sm:$0xf]
    %v1259 = vld [vmem:[%s3 + $0x49c] sm:$0xf]
    %v1260 = vld [vmem:[%s3 + $0x4a0] sm:$0xf]
    %v1261 = vld [vmem:[%s3 + $0x4a4] sm:$0xf]
    %v1262 = vld [vmem:[%s3 + $0x4a8] sm:$0xf]
    %v1263 = vld [vmem:[%s3 + $0x4ac] sm:$0xf]
    %v1264 = vld [vmem:[%s3 + $0x4b0] sm:$0xf]
    %v1265 = vld [vmem:[%s3 + $0x4b4] sm:$0xf]
    %v1266 = vld [vmem:[%s3 + $0x4b8] sm:$0xf]
    %v1267 = vld [vmem:[%s3 + $0x4bc] sm:$0xf]
    %v1268 = vld [vmem:[%s3 + $0x4c0] sm:$0xf]
    %v1269 = vld [vmem:[%s3 + $0x4c4] sm:$0xf]
    %v1270 = vld [vmem:[%s3 + $0x4c8] sm:$0xf]
    %v1271 = vld [vmem:[%s3 + $0x4cc] sm:$0xf]
    %v1272 = vld [vmem:[%s3 + $0x4d0] sm:$0xf]
    %v1273 = vld [vmem:[%s3 + $0x4d4] sm:$0xf]
    %v1274 = vld [vmem:[%s3 + $0x4d8] sm:$0xf]
    %v1275 = vld [vmem:[%s3 + $0x4dc] sm:$0xf]
    %v1276 = vld [vmem:[%s3 + $0x4e0] sm:$0xf]
    %v1277 = vld [vmem:[%s3 + $0x4e4] sm:$0xf]
    %v1278 = vld [vmem:[%s3 + $0x4e8] sm:$0xf]
    %v1279 = vld [vmem:[%s3 + $0x4ec] sm:$0xf]
    %v1280 = vld [vmem:[%s3 + $0x4f0] sm:$0xf]
    %v1281 = vld [vmem:[%s3 + $0x4f4] sm:$0xf]
    %v1282 = vld [vmem:[%s3 + $0x4f8] sm:$0xf]
    %v1283 = vld [vmem:[%s3 + $0x4fc] sm:$0xf]
    %v1284 = vld [vmem:[%s3 + $0x500] sm:$0xf]
    %v1285 = vld [vmem:[%s3 + $0x504] sm:$0xf]
    %v1286 = vld [vmem:[%s3 + $0x508] sm:$0xf]
    %v1287 = vld [vmem:[%s3 + $0x50c] sm:$0xf]
    %v1288 = vld [vmem:[%s3 + $0x510] sm:$0xf]
    %v1289 = vld [vmem:[%s3 + $0x514] sm:$0xf]
    %v1290 = vld [vmem:[%s3 + $0x518] sm:$0xf]
    %v1291 = vld [vmem:[%s3 + $0x51c] sm:$0xf]
    %v1292 = vld [vmem:[%s3 + $0x520] sm:$0xf]
    %v1293 = vld [vmem:[%s3 + $0x524] sm:$0xf]
    %v1294 = vld [vmem:[%s3 + $0x528] sm:$0xf]
    %v1295 = vld [vmem:[%s3 + $0x52c] sm:$0xf]
    %v1296 = vld [vmem:[%s3 + $0x530] sm:$0xf]
    %v1297 = vld [vmem:[%s3 + $0x534] sm:$0xf]
    %v1298 = vld [vmem:[%s3 + $0x538] sm:$0xf]
    %v1299 = vld [vmem:[%s3 + $0x53c] sm:$0xf]
    %v1300 = vld [vmem:[%s3 + $0x540] sm:$0xf]
    %v1301 = vld [vmem:[%s3 + $0x544] sm:$0xf]
    %v1302 = vld [vmem:[%s3 + $0x548] sm:$0xf]
    %v1303 = vld [vmem:[%s3 + $0x54c] sm:$0xf]
    %v1304 = vld [vmem:[%s3 + $0x550] sm:$0xf]
    %v1305 = vld [vmem:[%s3 + $0x554] sm:$0xf]
    %v1306 = vld [vmem:[%s3 + $0x558] sm:$0xf]
    %v1307 = vld [vmem:[%s3 + $0x55c] sm:$0xf]
    %v1308 = vld [vmem:[%s3 + $0x560] sm:$0xf]
    %v1309 = vld [vmem:[%s3 + $0x564] sm:$0xf]
    %v1310 = vld [vmem:[%s3 + $0x568] sm:$0xf]
    %v1311 = vld [vmem:[%s3 + $0x56c] sm:$0xf]
    %v1312 = vld [vmem:[%s3 + $0x570] sm:$0xf]
    %v1313 = vld [vmem:[%s3 + $0x574] sm:$0xf]
    %v1314 = vld [vmem:[%s3 + $0x578] sm:$0xf]
    %v1315 = vld [vmem:[%s3 + $0x57c] sm:$0xf]
    %v1316 = vld [vmem:[%s3 + $0x580] sm:$0xf]
    %v1317 = vld [vmem:[%s3 + $0x584] sm:$0xf]
    %v1318 = vld [vmem:[%s3 + $0x588] sm:$0xf]
    %v1319 = vld [vmem:[%s3 + $0x58c] sm:$0xf]
    %v1320 = vld [vmem:[%s3 + $0x590] sm:$0xf]
    %v1321 = vld [vmem:[%s3 + $0x594] sm:$0xf]
    %v1322 = vld [vmem:[%s3 + $0x598] sm:$0xf]
    %v1323 = vld [vmem:[%s3 + $0x59c] sm:$0xf]
    %v1324 = vld [vmem:[%s3 + $0x5a0] sm:$0xf]
    %v1325 = vld [vmem:[%s3 + $0x5a4] sm:$0xf]
    %v1326 = vld [vmem:[%s3 + $0x5a8] sm:$0xf]
    %v1327 = vld [vmem:[%s3 + $0x5ac] sm:$0xf]
    %v1328 = vld [vmem:[%s3 + $0x5b0] sm:$0xf]
    %v1329 = vld [vmem:[%s3 + $0x5b4] sm:$0xf]
    %v1330 = vld [vmem:[%s3 + $0x5b8] sm:$0xf]
    %v1331 = vld [vmem:[%s3 + $0x5bc] sm:$0xf]
    %v1332 = vld [vmem:[%s3 + $0x5c0] sm:$0xf]
    %v1333 = vld [vmem:[%s3 + $0x5c4] sm:$0xf]
    %v1334 = vld [vmem:[%s3 + $0x5c8] sm:$0xf]
    %v1335 = vld [vmem:[%s3 + $0x5cc] sm:$0xf]
    %v1336 = vld [vmem:[%s3 + $0x5d0] sm:$0xf]
    %v1337 = vld [vmem:[%s3 + $0x5d4] sm:$0xf]
    %v1338 = vld [vmem:[%s3 + $0x5d8] sm:$0xf]
    %v1339 = vld [vmem:[%s3 + $0x5dc] sm:$0xf]
    %v1340 = vld [vmem:[%s3 + $0x5e0] sm:$0xf]
    %v1341 = vld [vmem:[%s3 + $0x5e4] sm:$0xf]
    %v1342 = vld [vmem:[%s3 + $0x5e8] sm:$0xf]
    %v1343 = vld [vmem:[%s3 + $0x5ec] sm:$0xf]
    %v1344 = vld [vmem:[%s3 + $0x5f0] sm:$0xf]
    %v1345 = vld [vmem:[%s3 + $0x5f4] sm:$0xf]
    %v1346 = vld [vmem:[%s3 + $0x5f8] sm:$0xf]
    %v1347 = vld [vmem:[%s3 + $0x5fc] sm:$0xf]
    %v1348 = vld [vmem:[%s3 + $0x600] sm:$0xf]
    %v1349 = vld [vmem:[%s3 + $0x604] sm:$0xf]
    %v1350 = vld [vmem:[%s3 + $0x608] sm:$0xf]
    %v1351 = vld [vmem:[%s3 + $0x60c] sm:$0xf]
    %v1352 = vld [vmem:[%s3 + $0x610] sm:$0xf]
    %v1353 = vld [vmem:[%s3 + $0x614] sm:$0xf]
    %v1354 = vld [vmem:[%s3 + $0x618] sm:$0xf]
    %v1355 = vld [vmem:[%s3 + $0x61c] sm:$0xf]
    %v1356 = vld [vmem:[%s3 + $0x620] sm:$0xf]
    %v1357 = vld [vmem:[%s3 + $0x624] sm:$0xf]
    %v1358 = vld [vmem:[%s3 + $0x628] sm:$0xf]
    %v1359 = vld [vmem:[%s3 + $0x62c] sm:$0xf]
    %v1360 = vld [vmem:[%s3 + $0x630] sm:$0xf]
    %v1361 = vld [vmem:[%s3 + $0x634] sm:$0xf]
    %v1362 = vld [vmem:[%s3 + $0x638] sm:$0xf]
    %v1363 = vld [vmem:[%s3 + $0x63c] sm:$0xf]
    %v1364 = vld [vmem:[%s3 + $0x640] sm:$0xf]
    %v1365 = vld [vmem:[%s3 + $0x644] sm:$0xf]
    %v1366 = vld [vmem:[%s3 + $0x648] sm:$0xf]
    %v1367 = vld [vmem:[%s3 + $0x64c] sm:$0xf]
    %v1368 = vld [vmem:[%s3 + $0x650] sm:$0xf]
    %v1369 = vld [vmem:[%s3 + $0x654] sm:$0xf]
    %v1370 = vld [vmem:[%s3 + $0x658] sm:$0xf]
    %v1371 = vld [vmem:[%s3 + $0x65c] sm:$0xf]
    %v1372 = vld [vmem:[%s3 + $0x660] sm:$0xf]
    %v1373 = vld [vmem:[%s3 + $0x664] sm:$0xf]
    %v1374 = vld [vmem:[%s3 + $0x668] sm:$0xf]
    %v1375 = vld [vmem:[%s3 + $0x66c] sm:$0xf]
    %v1376 = vld [vmem:[%s3 + $0x670] sm:$0xf]
    %v1377 = vld [vmem:[%s3 + $0x674] sm:$0xf]
    %v1378 = vld [vmem:[%s3 + $0x678] sm:$0xf]
    %v1379 = vld [vmem:[%s3 + $0x67c] sm:$0xf]
    %v1380 = vld [vmem:[%s3 + $0x680] sm:$0xf]
    %v1381 = vld [vmem:[%s3 + $0x684] sm:$0xf]
    %v1382 = vld [vmem:[%s3 + $0x688] sm:$0xf]
    %v1383 = vld [vmem:[%s3 + $0x68c] sm:$0xf]
    %v1384 = vld [vmem:[%s3 + $0x690] sm:$0xf]
    %v1385 = vld [vmem:[%s3 + $0x694] sm:$0xf]
    %v1386 = vld [vmem:[%s3 + $0x698] sm:$0xf]
    %v1387 = vld [vmem:[%s3 + $0x69c] sm:$0xf]
    %v1388 = vld [vmem:[%s3 + $0x6a0] sm:$0xf]
    %v1389 = vld [vmem:[%s3 + $0x6a4] sm:$0xf]
    %v1390 = vld [vmem:[%s3 + $0x6a8] sm:$0xf]
    %v1391 = vld [vmem:[%s3 + $0x6ac] sm:$0xf]
    %v1392 = vld [vmem:[%s3 + $0x6b0] sm:$0xf]
    %v1393 = vld [vmem:[%s3 + $0x6b4] sm:$0xf]
    %v1394 = vld [vmem:[%s3 + $0x6b8] sm:$0xf]
    %v1395 = vld [vmem:[%s3 + $0x6bc] sm:$0xf]
    %v1396 = vld [vmem:[%s3 + $0x6c0] sm:$0xf]
    %v1397 = vld [vmem:[%s3 + $0x6c4] sm:$0xf]
    %v1398 = vld [vmem:[%s3 + $0x6c8] sm:$0xf]
    %v1399 = vld [vmem:[%s3 + $0x6cc] sm:$0xf]
    %v1400 = vld [vmem:[%s3 + $0x6d0] sm:$0xf]
    %v1401 = vld [vmem:[%s3 + $0x6d4] sm:$0xf]
    %v1402 = vld [vmem:[%s3 + $0x6d8] sm:$0xf]
    %v1403 = vld [vmem:[%s3 + $0x6dc] sm:$0xf]
    %v1404 = vld [vmem:[%s3 + $0x6e0] sm:$0xf]
    %v1405 = vld [vmem:[%s3 + $0x6e4] sm:$0xf]
    %v1406 = vld [vmem:[%s3 + $0x6e8] sm:$0xf]
    %v1407 = vld [vmem:[%s3 + $0x6ec] sm:$0xf]
    %v1408 = vld [vmem:[%s3 + $0x6f0] sm:$0xf]
    %v1409 = vld [vmem:[%s3 + $0x6f4] sm:$0xf]
    %v1410 = vld [vmem:[%s3 + $0x6f8] sm:$0xf]
    %v1411 = vld [vmem:[%s3 + $0x6fc] sm:$0xf]
    %v1412 = vld [vmem:[%s3 + $0x700] sm:$0xf]
    %v1413 = vld [vmem:[%s3 + $0x704] sm:$0xf]
    %v1414 = vld [vmem:[%s3 + $0x708] sm:$0xf]
    %v1415 = vld [vmem:[%s3 + $0x70c] sm:$0xf]
    %v1416 = vld [vmem:[%s3 + $0x710] sm:$0xf]
    %v1417 = vld [vmem:[%s3 + $0x714] sm:$0xf]
    %v1418 = vld [vmem:[%s3 + $0x718] sm:$0xf]
    %v1419 = vld [vmem:[%s3 + $0x71c] sm:$0xf]
    %v1420 = vld [vmem:[%s3 + $0x720] sm:$0xf]
    %v1421 = vld [vmem:[%s3 + $0x724] sm:$0xf]
    %v1422 = vld [vmem:[%s3 + $0x728] sm:$0xf]
    %v1423 = vld [vmem:[%s3 + $0x72c] sm:$0xf]
    %v1424 = vld [vmem:[%s3 + $0x730] sm:$0xf]
    %v1425 = vld [vmem:[%s3 + $0x734] sm:$0xf]
    %v1426 = vld [vmem:[%s3 + $0x738] sm:$0xf]
    %v1427 = vld [vmem:[%s3 + $0x73c] sm:$0xf]
    %v1428 = vld [vmem:[%s3 + $0x740] sm:$0xf]
    %v1429 = vld [vmem:[%s3 + $0x744] sm:$0xf]
    %v1430 = vld [vmem:[%s3 + $0x748] sm:$0xf]
    %v1431 = vld [vmem:[%s3 + $0x74c] sm:$0xf]
    %v1432 = vld [vmem:[%s3 + $0x750] sm:$0xf]
    %v1433 = vld [vmem:[%s3 + $0x754] sm:$0xf]
    %v1434 = vld [vmem:[%s3 + $0x758] sm:$0xf]
    %v1435 = vld [vmem:[%s3 + $0x75c] sm:$0xf]
    %v1436 = vld [vmem:[%s3 + $0x760] sm:$0xf]
    %v1437 = vld [vmem:[%s3 + $0x764] sm:$0xf]
    %v1438 = vld [vmem:[%s3 + $0x768] sm:$0xf]
    %v1439 = vld [vmem:[%s3 + $0x76c] sm:$0xf]
    %v1440 = vld [vmem:[%s3 + $0x770] sm:$0xf]
    %v1441 = vld [vmem:[%s3 + $0x774] sm:$0xf]
    %v1442 = vld [vmem:[%s3 + $0x778] sm:$0xf]
    %v1443 = vld [vmem:[%s3 + $0x77c] sm:$0xf]
    %v1444 = vld [vmem:[%s3 + $0x780] sm:$0xf]
    %v1445 = vld [vmem:[%s3 + $0x784] sm:$0xf]
    %v1446 = vld [vmem:[%s3 + $0x788] sm:$0xf]
    %v1447 = vld [vmem:[%s3 + $0x78c] sm:$0xf]
    %v1448 = vld [vmem:[%s3 + $0x790] sm:$0xf]
    %v1449 = vld [vmem:[%s3 + $0x794] sm:$0xf]
    %v1450 = vld [vmem:[%s3 + $0x798] sm:$0xf]
    %v1451 = vld [vmem:[%s3 + $0x79c] sm:$0xf]
    %v1452 = vld [vmem:[%s3 + $0x7a0] sm:$0xf]
    %v1453 = vld [vmem:[%s3 + $0x7a4] sm:$0xf]
    %v1454 = vld [vmem:[%s3 + $0x7a8] sm:$0xf]
    %v1455 = vld [vmem:[%s3 + $0x7ac] sm:$0xf]
    %v1456 = vld [vmem:[%s3 + $0x7b0] sm:$0xf]
    %v1457 = vld [vmem:[%s3 + $0x7b4] sm:$0xf]
    %v1458 = vld [vmem:[%s3 + $0x7b8] sm:$0xf]
    %v1459 = vld [vmem:[%s3 + $0x7bc] sm:$0xf]
    %v1460 = vld [vmem:[%s3 + $0x7c0] sm:$0xf]
    %v1461 = vld [vmem:[%s3 + $0x7c4] sm:$0xf]
    %v1462 = vld [vmem:[%s3 + $0x7c8] sm:$0xf]
    %v1463 = vld [vmem:[%s3 + $0x7cc] sm:$0xf]
    %v1464 = vld [vmem:[%s3 + $0x7d0] sm:$0xf]
    %v1465 = vld [vmem:[%s3 + $0x7d4] sm:$0xf]
    %v1466 = vld [vmem:[%s3 + $0x7d8] sm:$0xf]
    %v1467 = vld [vmem:[%s3 + $0x7dc] sm:$0xf]
    %v1468 = vld [vmem:[%s3 + $0x7e0] sm:$0xf]
    %v1469 = vld [vmem:[%s3 + $0x7e4] sm:$0xf]
    %v1470 = vld [vmem:[%s3 + $0x7e8] sm:$0xf]
    %v1471 = vld [vmem:[%s3 + $0x7ec] sm:$0xf]
    %v1472 = vld [vmem:[%s3 + $0x7f0] sm:$0xf]
    %v1473 = vld [vmem:[%s3 + $0x7f4] sm:$0xf]
    %v1474 = vld [vmem:[%s3 + $0x7f8] sm:$0xf]
    %v1475 = vld [vmem:[%s3 + $0x7fc] sm:$0xf]
    %v1988 = vunpack.c.l.b16 %v964
    %v1989 = vunpack.c.l.b16 %v965
    %v1990 = vunpack.c.l.b16 %v966
    %v1991 = vunpack.c.l.b16 %v967
    %v1992 = vunpack.c.l.b16 %v968
    %v1993 = vunpack.c.l.b16 %v969
    %v1994 = vunpack.c.l.b16 %v970
    %v1995 = vunpack.c.l.b16 %v971
    %v1996 = vunpack.c.l.b16 %v972
    %v1997 = vunpack.c.l.b16 %v973
    %v1998 = vunpack.c.l.b16 %v974
    %v1999 = vunpack.c.l.b16 %v975
    %v2000 = vunpack.c.l.b16 %v976
    %v2001 = vunpack.c.l.b16 %v977
    %v2002 = vunpack.c.l.b16 %v978
    %v2003 = vunpack.c.l.b16 %v979
    %v2004 = vunpack.c.l.b16 %v980
    %v2005 = vunpack.c.l.b16 %v981
    %v2006 = vunpack.c.l.b16 %v982
    %v2007 = vunpack.c.l.b16 %v983
    %v2008 = vunpack.c.l.b16 %v984
    %v2009 = vunpack.c.l.b16 %v985
    %v2010 = vunpack.c.l.b16 %v986
    %v2011 = vunpack.c.l.b16 %v987
    %v2012 = vunpack.c.l.b16 %v988
    %v2013 = vunpack.c.l.b16 %v989
    %v2014 = vunpack.c.l.b16 %v990
    %v2015 = vunpack.c.l.b16 %v991
    %v2016 = vunpack.c.l.b16 %v992
    %v2017 = vunpack.c.l.b16 %v993
    %v2018 = vunpack.c.l.b16 %v994
    %v2019 = vunpack.c.l.b16 %v995
    %v2020 = vunpack.c.l.b16 %v996
    %v2021 = vunpack.c.l.b16 %v997
    %v2022 = vunpack.c.l.b16 %v998
    %v2023 = vunpack.c.l.b16 %v999
    %v2024 = vunpack.c.l.b16 %v1000
    %v2025 = vunpack.c.l.b16 %v1001
    %v2026 = vunpack.c.l.b16 %v1002
    %v2027 = vunpack.c.l.b16 %v1003
    %v2028 = vunpack.c.l.b16 %v1004
    %v2029 = vunpack.c.l.b16 %v1005
    %v2030 = vunpack.c.l.b16 %v1006
    %v2031 = vunpack.c.l.b16 %v1007
    %v2032 = vunpack.c.l.b16 %v1008
    %v2033 = vunpack.c.l.b16 %v1009
    %v2034 = vunpack.c.l.b16 %v1010
    %v2035 = vunpack.c.l.b16 %v1011
    %v2036 = vunpack.c.l.b16 %v1012
    %v2037 = vunpack.c.l.b16 %v1013
    %v2038 = vunpack.c.l.b16 %v1014
    %v2039 = vunpack.c.l.b16 %v1015
    %v2040 = vunpack.c.l.b16 %v1016
    %v2041 = vunpack.c.l.b16 %v1017
    %v2042 = vunpack.c.l.b16 %v1018
    %v2043 = vunpack.c.l.b16 %v1019
    %v2044 = vunpack.c.l.b16 %v1020
    %v2045 = vunpack.c.l.b16 %v1021
    %v2046 = vunpack.c.l.b16 %v1022
    %v2047 = vunpack.c.l.b16 %v1023
    %v2048 = vunpack.c.l.b16 %v1024
    %v2049 = vunpack.c.l.b16 %v1025
    %v2050 = vunpack.c.l.b16 %v1026
    %v2051 = vunpack.c.l.b16 %v1027
    %v2052 = vunpack.c.l.b16 %v1028
    %v2053 = vunpack.c.l.b16 %v1029
    %v2054 = vunpack.c.l.b16 %v1030
    %v2055 = vunpack.c.l.b16 %v1031
    %v2056 = vunpack.c.l.b16 %v1032
    %v2057 = vunpack.c.l.b16 %v1033
    %v2058 = vunpack.c.l.b16 %v1034
    %v2059 = vunpack.c.l.b16 %v1035
    %v2060 = vunpack.c.l.b16 %v1036
    %v2061 = vunpack.c.l.b16 %v1037
    %v2062 = vunpack.c.l.b16 %v1038
    %v2063 = vunpack.c.l.b16 %v1039
    %v2064 = vunpack.c.l.b16 %v1040
    %v2065 = vunpack.c.l.b16 %v1041
    %v2066 = vunpack.c.l.b16 %v1042
    %v2067 = vunpack.c.l.b16 %v1043
    %v2068 = vunpack.c.l.b16 %v1044
    %v2069 = vunpack.c.l.b16 %v1045
    %v2070 = vunpack.c.l.b16 %v1046
    %v2071 = vunpack.c.l.b16 %v1047
    %v2072 = vunpack.c.l.b16 %v1048
    %v2073 = vunpack.c.l.b16 %v1049
    %v2074 = vunpack.c.l.b16 %v1050
    %v2075 = vunpack.c.l.b16 %v1051
    %v2076 = vunpack.c.l.b16 %v1052
    %v2077 = vunpack.c.l.b16 %v1053
    %v2078 = vunpack.c.l.b16 %v1054
    %v2079 = vunpack.c.l.b16 %v1055
    %v2080 = vunpack.c.l.b16 %v1056
    %v2081 = vunpack.c.l.b16 %v1057
    %v2082 = vunpack.c.l.b16 %v1058
    %v2083 = vunpack.c.l.b16 %v1059
    %v2084 = vunpack.c.l.b16 %v1060
    %v2085 = vunpack.c.l.b16 %v1061
    %v2086 = vunpack.c.l.b16 %v1062
    %v2087 = vunpack.c.l.b16 %v1063
    %v2088 = vunpack.c.l.b16 %v1064
    %v2089 = vunpack.c.l.b16 %v1065
    %v2090 = vunpack.c.l.b16 %v1066
    %v2091 = vunpack.c.l.b16 %v1067
    %v2092 = vunpack.c.l.b16 %v1068
    %v2093 = vunpack.c.l.b16 %v1069
    %v2094 = vunpack.c.l.b16 %v1070
    %v2095 = vunpack.c.l.b16 %v1071
    %v2096 = vunpack.c.l.b16 %v1072
    %v2097 = vunpack.c.l.b16 %v1073
    %v2098 = vunpack.c.l.b16 %v1074
    %v2099 = vunpack.c.l.b16 %v1075
    %v2100 = vunpack.c.l.b16 %v1076
    %v2101 = vunpack.c.l.b16 %v1077
    %v2102 = vunpack.c.l.b16 %v1078
    %v2103 = vunpack.c.l.b16 %v1079
    %v2104 = vunpack.c.l.b16 %v1080
    %v2105 = vunpack.c.l.b16 %v1081
    %v2106 = vunpack.c.l.b16 %v1082
    %v2107 = vunpack.c.l.b16 %v1083
    %v2108 = vunpack.c.l.b16 %v1084
    %v2109 = vunpack.c.l.b16 %v1085
    %v2110 = vunpack.c.l.b16 %v1086
    %v2111 = vunpack.c.l.b16 %v1087
    %v2112 = vunpack.c.l.b16 %v1088
    %v2113 = vunpack.c.l.b16 %v1089
    %v2114 = vunpack.c.l.b16 %v1090
    %v2115 = vunpack.c.l.b16 %v1091
    %v2116 = vunpack.c.l.b16 %v1092
    %v2117 = vunpack.c.l.b16 %v1093
    %v2118 = vunpack.c.l.b16 %v1094
    %v2119 = vunpack.c.l.b16 %v1095
    %v2120 = vunpack.c.l.b16 %v1096
    %v2121 = vunpack.c.l.b16 %v1097
    %v2122 = vunpack.c.l.b16 %v1098
    %v2123 = vunpack.c.l.b16 %v1099
    %v2124 = vunpack.c.l.b16 %v1100
    %v2125 = vunpack.c.l.b16 %v1101
    %v2126 = vunpack.c.l.b16 %v1102
    %v2127 = vunpack.c.l.b16 %v1103
    %v2128 = vunpack.c.l.b16 %v1104
    %v2129 = vunpack.c.l.b16 %v1105
    %v2130 = vunpack.c.l.b16 %v1106
    %v2131 = vunpack.c.l.b16 %v1107
    %v2132 = vunpack.c.l.b16 %v1108
    %v2133 = vunpack.c.l.b16 %v1109
    %v2134 = vunpack.c.l.b16 %v1110
    %v2135 = vunpack.c.l.b16 %v1111
    %v2136 = vunpack.c.l.b16 %v1112
    %v2137 = vunpack.c.l.b16 %v1113
    %v2138 = vunpack.c.l.b16 %v1114
    %v2139 = vunpack.c.l.b16 %v1115
    %v2140 = vunpack.c.l.b16 %v1116
    %v2141 = vunpack.c.l.b16 %v1117
    %v2142 = vunpack.c.l.b16 %v1118
    %v2143 = vunpack.c.l.b16 %v1119
    %v2144 = vunpack.c.l.b16 %v1120
    %v2145 = vunpack.c.l.b16 %v1121
    %v2146 = vunpack.c.l.b16 %v1122
    %v2147 = vunpack.c.l.b16 %v1123
    %v2148 = vunpack.c.l.b16 %v1124
    %v2149 = vunpack.c.l.b16 %v1125
    %v2150 = vunpack.c.l.b16 %v1126
    %v2151 = vunpack.c.l.b16 %v1127
    %v2152 = vunpack.c.l.b16 %v1128
    %v2153 = vunpack.c.l.b16 %v1129
    %v2154 = vunpack.c.l.b16 %v1130
    %v2155 = vunpack.c.l.b16 %v1131
    %v2156 = vunpack.c.l.b16 %v1132
    %v2157 = vunpack.c.l.b16 %v1133
    %v2158 = vunpack.c.l.b16 %v1134
    %v2159 = vunpack.c.l.b16 %v1135
    %v2160 = vunpack.c.l.b16 %v1136
    %v2161 = vunpack.c.l.b16 %v1137
    %v2162 = vunpack.c.l.b16 %v1138
    %v2163 = vunpack.c.l.b16 %v1139
    %v2164 = vunpack.c.l.b16 %v1140
    %v2165 = vunpack.c.l.b16 %v1141
    %v2166 = vunpack.c.l.b16 %v1142
    %v2167 = vunpack.c.l.b16 %v1143
    %v2168 = vunpack.c.l.b16 %v1144
    %v2169 = vunpack.c.l.b16 %v1145
    %v2170 = vunpack.c.l.b16 %v1146
    %v2171 = vunpack.c.l.b16 %v1147
    %v2172 = vunpack.c.l.b16 %v1148
    %v2173 = vunpack.c.l.b16 %v1149
    %v2174 = vunpack.c.l.b16 %v1150
    %v2175 = vunpack.c.l.b16 %v1151
    %v2176 = vunpack.c.l.b16 %v1152
    %v2177 = vunpack.c.l.b16 %v1153
    %v2178 = vunpack.c.l.b16 %v1154
    %v2179 = vunpack.c.l.b16 %v1155
    %v2180 = vunpack.c.l.b16 %v1156
    %v2181 = vunpack.c.l.b16 %v1157
    %v2182 = vunpack.c.l.b16 %v1158
    %v2183 = vunpack.c.l.b16 %v1159
    %v2184 = vunpack.c.l.b16 %v1160
    %v2185 = vunpack.c.l.b16 %v1161
    %v2186 = vunpack.c.l.b16 %v1162
    %v2187 = vunpack.c.l.b16 %v1163
    %v2188 = vunpack.c.l.b16 %v1164
    %v2189 = vunpack.c.l.b16 %v1165
    %v2190 = vunpack.c.l.b16 %v1166
    %v2191 = vunpack.c.l.b16 %v1167
    %v2192 = vunpack.c.l.b16 %v1168
    %v2193 = vunpack.c.l.b16 %v1169
    %v2194 = vunpack.c.l.b16 %v1170
    %v2195 = vunpack.c.l.b16 %v1171
    %v2196 = vunpack.c.l.b16 %v1172
    %v2197 = vunpack.c.l.b16 %v1173
    %v2198 = vunpack.c.l.b16 %v1174
    %v2199 = vunpack.c.l.b16 %v1175
    %v2200 = vunpack.c.l.b16 %v1176
    %v2201 = vunpack.c.l.b16 %v1177
    %v2202 = vunpack.c.l.b16 %v1178
    %v2203 = vunpack.c.l.b16 %v1179
    %v2204 = vunpack.c.l.b16 %v1180
    %v2205 = vunpack.c.l.b16 %v1181
    %v2206 = vunpack.c.l.b16 %v1182
    %v2207 = vunpack.c.l.b16 %v1183
    %v2208 = vunpack.c.l.b16 %v1184
    %v2209 = vunpack.c.l.b16 %v1185
    %v2210 = vunpack.c.l.b16 %v1186
    %v2211 = vunpack.c.l.b16 %v1187
    %v2212 = vunpack.c.l.b16 %v1188
    %v2213 = vunpack.c.l.b16 %v1189
    %v2214 = vunpack.c.l.b16 %v1190
    %v2215 = vunpack.c.l.b16 %v1191
    %v2216 = vunpack.c.l.b16 %v1192
    %v2217 = vunpack.c.l.b16 %v1193
    %v2218 = vunpack.c.l.b16 %v1194
    %v2219 = vunpack.c.l.b16 %v1195
    %v2220 = vunpack.c.l.b16 %v1196
    %v2221 = vunpack.c.l.b16 %v1197
    %v2222 = vunpack.c.l.b16 %v1198
    %v2223 = vunpack.c.l.b16 %v1199
    %v2224 = vunpack.c.l.b16 %v1200
    %v2225 = vunpack.c.l.b16 %v1201
    %v2226 = vunpack.c.l.b16 %v1202
    %v2227 = vunpack.c.l.b16 %v1203
    %v2228 = vunpack.c.l.b16 %v1204
    %v2229 = vunpack.c.l.b16 %v1205
    %v2230 = vunpack.c.l.b16 %v1206
    %v2231 = vunpack.c.l.b16 %v1207
    %v2232 = vunpack.c.l.b16 %v1208
    %v2233 = vunpack.c.l.b16 %v1209
    %v2234 = vunpack.c.l.b16 %v1210
    %v2235 = vunpack.c.l.b16 %v1211
    %v2236 = vunpack.c.l.b16 %v1212
    %v2237 = vunpack.c.l.b16 %v1213
    %v2238 = vunpack.c.l.b16 %v1214
    %v2239 = vunpack.c.l.b16 %v1215
    %v2240 = vunpack.c.l.b16 %v1216
    %v2241 = vunpack.c.l.b16 %v1217
    %v2242 = vunpack.c.l.b16 %v1218
    %v2243 = vunpack.c.l.b16 %v1219
    %v2244 = vunpack.c.l.b16 %v1220
    %v2245 = vunpack.c.l.b16 %v1221
    %v2246 = vunpack.c.l.b16 %v1222
    %v2247 = vunpack.c.l.b16 %v1223
    %v2248 = vunpack.c.l.b16 %v1224
    %v2249 = vunpack.c.l.b16 %v1225
    %v2250 = vunpack.c.l.b16 %v1226
    %v2251 = vunpack.c.l.b16 %v1227
    %v2252 = vunpack.c.l.b16 %v1228
    %v2253 = vunpack.c.l.b16 %v1229
    %v2254 = vunpack.c.l.b16 %v1230
    %v2255 = vunpack.c.l.b16 %v1231
    %v2256 = vunpack.c.l.b16 %v1232
    %v2257 = vunpack.c.l.b16 %v1233
    %v2258 = vunpack.c.l.b16 %v1234
    %v2259 = vunpack.c.l.b16 %v1235
    %v2260 = vunpack.c.l.b16 %v1236
    %v2261 = vunpack.c.l.b16 %v1237
    %v2262 = vunpack.c.l.b16 %v1238
    %v2263 = vunpack.c.l.b16 %v1239
    %v2264 = vunpack.c.l.b16 %v1240
    %v2265 = vunpack.c.l.b16 %v1241
    %v2266 = vunpack.c.l.b16 %v1242
    %v2267 = vunpack.c.l.b16 %v1243
    %v2268 = vunpack.c.l.b16 %v1244
    %v2269 = vunpack.c.l.b16 %v1245
    %v2270 = vunpack.c.l.b16 %v1246
    %v2271 = vunpack.c.l.b16 %v1247
    %v2272 = vunpack.c.l.b16 %v1248
    %v2273 = vunpack.c.l.b16 %v1249
    %v2274 = vunpack.c.l.b16 %v1250
    %v2275 = vunpack.c.l.b16 %v1251
    %v2276 = vunpack.c.l.b16 %v1252
    %v2277 = vunpack.c.l.b16 %v1253
    %v2278 = vunpack.c.l.b16 %v1254
    %v2279 = vunpack.c.l.b16 %v1255
    %v2280 = vunpack.c.l.b16 %v1256
    %v2281 = vunpack.c.l.b16 %v1257
    %v2282 = vunpack.c.l.b16 %v1258
    %v2283 = vunpack.c.l.b16 %v1259
    %v2284 = vunpack.c.l.b16 %v1260
    %v2285 = vunpack.c.l.b16 %v1261
    %v2286 = vunpack.c.l.b16 %v1262
    %v2287 = vunpack.c.l.b16 %v1263
    %v2288 = vunpack.c.l.b16 %v1264
    %v2289 = vunpack.c.l.b16 %v1265
    %v2290 = vunpack.c.l.b16 %v1266
    %v2291 = vunpack.c.l.b16 %v1267
    %v2292 = vunpack.c.l.b16 %v1268
    %v2293 = vunpack.c.l.b16 %v1269
    %v2294 = vunpack.c.l.b16 %v1270
    %v2295 = vunpack.c.l.b16 %v1271
    %v2296 = vunpack.c.l.b16 %v1272
    %v2297 = vunpack.c.l.b16 %v1273
    %v2298 = vunpack.c.l.b16 %v1274
    %v2299 = vunpack.c.l.b16 %v1275
    %v2300 = vunpack.c.l.b16 %v1276
    %v2301 = vunpack.c.l.b16 %v1277
    %v2302 = vunpack.c.l.b16 %v1278
    %v2303 = vunpack.c.l.b16 %v1279
    %v2304 = vunpack.c.l.b16 %v1280
    %v2305 = vunpack.c.l.b16 %v1281
    %v2306 = vunpack.c.l.b16 %v1282
    %v2307 = vunpack.c.l.b16 %v1283
    %v2308 = vunpack.c.l.b16 %v1284
    %v2309 = vunpack.c.l.b16 %v1285
    %v2310 = vunpack.c.l.b16 %v1286
    %v2311 = vunpack.c.l.b16 %v1287
    %v2312 = vunpack.c.l.b16 %v1288
    %v2313 = vunpack.c.l.b16 %v1289
    %v2314 = vunpack.c.l.b16 %v1290
    %v2315 = vunpack.c.l.b16 %v1291
    %v2316 = vunpack.c.l.b16 %v1292
    %v2317 = vunpack.c.l.b16 %v1293
    %v2318 = vunpack.c.l.b16 %v1294
    %v2319 = vunpack.c.l.b16 %v1295
    %v2320 = vunpack.c.l.b16 %v1296
    %v2321 = vunpack.c.l.b16 %v1297
    %v2322 = vunpack.c.l.b16 %v1298
    %v2323 = vunpack.c.l.b16 %v1299
    %v2324 = vunpack.c.l.b16 %v1300
    %v2325 = vunpack.c.l.b16 %v1301
    %v2326 = vunpack.c.l.b16 %v1302
    %v2327 = vunpack.c.l.b16 %v1303
    %v2328 = vunpack.c.l.b16 %v1304
    %v2329 = vunpack.c.l.b16 %v1305
    %v2330 = vunpack.c.l.b16 %v1306
    %v2331 = vunpack.c.l.b16 %v1307
    %v2332 = vunpack.c.l.b16 %v1308
    %v2333 = vunpack.c.l.b16 %v1309
    %v2334 = vunpack.c.l.b16 %v1310
    %v2335 = vunpack.c.l.b16 %v1311
    %v2336 = vunpack.c.l.b16 %v1312
    %v2337 = vunpack.c.l.b16 %v1313
    %v2338 = vunpack.c.l.b16 %v1314
    %v2339 = vunpack.c.l.b16 %v1315
    %v2340 = vunpack.c.l.b16 %v1316
    %v2341 = vunpack.c.l.b16 %v1317
    %v2342 = vunpack.c.l.b16 %v1318
    %v2343 = vunpack.c.l.b16 %v1319
    %v2344 = vunpack.c.l.b16 %v1320
    %v2345 = vunpack.c.l.b16 %v1321
    %v2346 = vunpack.c.l.b16 %v1322
    %v2347 = vunpack.c.l.b16 %v1323
    %v2348 = vunpack.c.l.b16 %v1324
    %v2349 = vunpack.c.l.b16 %v1325
    %v2350 = vunpack.c.l.b16 %v1326
    %v2351 = vunpack.c.l.b16 %v1327
    %v2352 = vunpack.c.l.b16 %v1328
    %v2353 = vunpack.c.l.b16 %v1329
    %v2354 = vunpack.c.l.b16 %v1330
    %v2355 = vunpack.c.l.b16 %v1331
    %v2356 = vunpack.c.l.b16 %v1332
    %v2357 = vunpack.c.l.b16 %v1333
    %v2358 = vunpack.c.l.b16 %v1334
    %v2359 = vunpack.c.l.b16 %v1335
    %v2360 = vunpack.c.l.b16 %v1336
    %v2361 = vunpack.c.l.b16 %v1337
    %v2362 = vunpack.c.l.b16 %v1338
    %v2363 = vunpack.c.l.b16 %v1339
    %v2364 = vunpack.c.l.b16 %v1340
    %v2365 = vunpack.c.l.b16 %v1341
    %v2366 = vunpack.c.l.b16 %v1342
    %v2367 = vunpack.c.l.b16 %v1343
    %v2368 = vunpack.c.l.b16 %v1344
    %v2369 = vunpack.c.l.b16 %v1345
    %v2370 = vunpack.c.l.b16 %v1346
    %v2371 = vunpack.c.l.b16 %v1347
    %v2372 = vunpack.c.l.b16 %v1348
    %v2373 = vunpack.c.l.b16 %v1349
    %v2374 = vunpack.c.l.b16 %v1350
    %v2375 = vunpack.c.l.b16 %v1351
    %v2376 = vunpack.c.l.b16 %v1352
    %v2377 = vunpack.c.l.b16 %v1353
    %v2378 = vunpack.c.l.b16 %v1354
    %v2379 = vunpack.c.l.b16 %v1355
    %v2380 = vunpack.c.l.b16 %v1356
    %v2381 = vunpack.c.l.b16 %v1357
    %v2382 = vunpack.c.l.b16 %v1358
    %v2383 = vunpack.c.l.b16 %v1359
    %v2384 = vunpack.c.l.b16 %v1360
    %v2385 = vunpack.c.l.b16 %v1361
    %v2386 = vunpack.c.l.b16 %v1362
    %v2387 = vunpack.c.l.b16 %v1363
    %v2388 = vunpack.c.l.b16 %v1364
    %v2389 = vunpack.c.l.b16 %v1365
    %v2390 = vunpack.c.l.b16 %v1366
    %v2391 = vunpack.c.l.b16 %v1367
    %v2392 = vunpack.c.l.b16 %v1368
    %v2393 = vunpack.c.l.b16 %v1369
    %v2394 = vunpack.c.l.b16 %v1370
    %v2395 = vunpack.c.l.b16 %v1371
    %v2396 = vunpack.c.l.b16 %v1372
    %v2397 = vunpack.c.l.b16 %v1373
    %v2398 = vunpack.c.l.b16 %v1374
    %v2399 = vunpack.c.l.b16 %v1375
    %v2400 = vunpack.c.l.b16 %v1376
    %v2401 = vunpack.c.l.b16 %v1377
    %v2402 = vunpack.c.l.b16 %v1378
    %v2403 = vunpack.c.l.b16 %v1379
    %v2404 = vunpack.c.l.b16 %v1380
    %v2405 = vunpack.c.l.b16 %v1381
    %v2406 = vunpack.c.l.b16 %v1382
    %v2407 = vunpack.c.l.b16 %v1383
    %v2408 = vunpack.c.l.b16 %v1384
    %v2409 = vunpack.c.l.b16 %v1385
    %v2410 = vunpack.c.l.b16 %v1386
    %v2411 = vunpack.c.l.b16 %v1387
    %v2412 = vunpack.c.l.b16 %v1388
    %v2413 = vunpack.c.l.b16 %v1389
    %v2414 = vunpack.c.l.b16 %v1390
    %v2415 = vunpack.c.l.b16 %v1391
    %v2416 = vunpack.c.l.b16 %v1392
    %v2417 = vunpack.c.l.b16 %v1393
    %v2418 = vunpack.c.l.b16 %v1394
    %v2419 = vunpack.c.l.b16 %v1395
    %v2420 = vunpack.c.l.b16 %v1396
    %v2421 = vunpack.c.l.b16 %v1397
    %v2422 = vunpack.c.l.b16 %v1398
    %v2423 = vunpack.c.l.b16 %v1399
    %v2424 = vunpack.c.l.b16 %v1400
    %v2425 = vunpack.c.l.b16 %v1401
    %v2426 = vunpack.c.l.b16 %v1402
    %v2427 = vunpack.c.l.b16 %v1403
    %v2428 = vunpack.c.l.b16 %v1404
    %v2429 = vunpack.c.l.b16 %v1405
    %v2430 = vunpack.c.l.b16 %v1406
    %v2431 = vunpack.c.l.b16 %v1407
    %v2432 = vunpack.c.l.b16 %v1408
    %v2433 = vunpack.c.l.b16 %v1409
    %v2434 = vunpack.c.l.b16 %v1410
    %v2435 = vunpack.c.l.b16 %v1411
    %v2436 = vunpack.c.l.b16 %v1412
    %v2437 = vunpack.c.l.b16 %v1413
    %v2438 = vunpack.c.l.b16 %v1414
    %v2439 = vunpack.c.l.b16 %v1415
    %v2440 = vunpack.c.l.b16 %v1416
    %v2441 = vunpack.c.l.b16 %v1417
    %v2442 = vunpack.c.l.b16 %v1418
    %v2443 = vunpack.c.l.b16 %v1419
    %v2444 = vunpack.c.l.b16 %v1420
    %v2445 = vunpack.c.l.b16 %v1421
    %v2446 = vunpack.c.l.b16 %v1422
    %v2447 = vunpack.c.l.b16 %v1423
    %v2448 = vunpack.c.l.b16 %v1424
    %v2449 = vunpack.c.l.b16 %v1425
    %v2450 = vunpack.c.l.b16 %v1426
    %v2451 = vunpack.c.l.b16 %v1427
    %v2452 = vunpack.c.l.b16 %v1428
    %v2453 = vunpack.c.l.b16 %v1429
    %v2454 = vunpack.c.l.b16 %v1430
    %v2455 = vunpack.c.l.b16 %v1431
    %v2456 = vunpack.c.l.b16 %v1432
    %v2457 = vunpack.c.l.b16 %v1433
    %v2458 = vunpack.c.l.b16 %v1434
    %v2459 = vunpack.c.l.b16 %v1435
    %v2460 = vunpack.c.l.b16 %v1436
    %v2461 = vunpack.c.l.b16 %v1437
    %v2462 = vunpack.c.l.b16 %v1438
    %v2463 = vunpack.c.l.b16 %v1439
    %v2464 = vunpack.c.l.b16 %v1440
    %v2465 = vunpack.c.l.b16 %v1441
    %v2466 = vunpack.c.l.b16 %v1442
    %v2467 = vunpack.c.l.b16 %v1443
    %v2468 = vunpack.c.l.b16 %v1444
    %v2469 = vunpack.c.l.b16 %v1445
    %v2470 = vunpack.c.l.b16 %v1446
    %v2471 = vunpack.c.l.b16 %v1447
    %v2472 = vunpack.c.l.b16 %v1448
    %v2473 = vunpack.c.l.b16 %v1449
    %v2474 = vunpack.c.l.b16 %v1450
    %v2475 = vunpack.c.l.b16 %v1451
    %v2476 = vunpack.c.l.b16 %v1452
    %v2477 = vunpack.c.l.b16 %v1453
    %v2478 = vunpack.c.l.b16 %v1454
    %v2479 = vunpack.c.l.b16 %v1455
    %v2480 = vunpack.c.l.b16 %v1456
    %v2481 = vunpack.c.l.b16 %v1457
    %v2482 = vunpack.c.l.b16 %v1458
    %v2483 = vunpack.c.l.b16 %v1459
    %v2484 = vunpack.c.l.b16 %v1460
    %v2485 = vunpack.c.l.b16 %v1461
    %v2486 = vunpack.c.l.b16 %v1462
    %v2487 = vunpack.c.l.b16 %v1463
    %v2488 = vunpack.c.l.b16 %v1464
    %v2489 = vunpack.c.l.b16 %v1465
    %v2490 = vunpack.c.l.b16 %v1466
    %v2491 = vunpack.c.l.b16 %v1467
    %v2492 = vunpack.c.l.b16 %v1468
    %v2493 = vunpack.c.l.b16 %v1469
    %v2494 = vunpack.c.l.b16 %v1470
    %v2495 = vunpack.c.l.b16 %v1471
    %v2496 = vunpack.c.l.b16 %v1472
    %v2497 = vunpack.c.l.b16 %v1473
    %v2498 = vunpack.c.l.b16 %v1474
    %v2499 = vunpack.c.l.b16 %v1475
    %v2500 = vpack.c.b16 %v1989, %v1988
    %v2501 = vpack.c.b16 %v1991, %v1990
    %v2502 = vpack.c.b16 %v1993, %v1992
    %v2503 = vpack.c.b16 %v1995, %v1994
    %v2504 = vpack.c.b16 %v1997, %v1996
    %v2505 = vpack.c.b16 %v1999, %v1998
    %v2506 = vpack.c.b16 %v2001, %v2000
    %v2507 = vpack.c.b16 %v2003, %v2002
    %v2508 = vpack.c.b16 %v2005, %v2004
    %v2509 = vpack.c.b16 %v2007, %v2006
    %v2510 = vpack.c.b16 %v2009, %v2008
    %v2511 = vpack.c.b16 %v2011, %v2010
    %v2512 = vpack.c.b16 %v2013, %v2012
    %v2513 = vpack.c.b16 %v2015, %v2014
    %v2514 = vpack.c.b16 %v2017, %v2016
    %v2515 = vpack.c.b16 %v2019, %v2018
    %v2516 = vpack.c.b16 %v2021, %v2020
    %v2517 = vpack.c.b16 %v2023, %v2022
    %v2518 = vpack.c.b16 %v2025, %v2024
    %v2519 = vpack.c.b16 %v2027, %v2026
    %v2520 = vpack.c.b16 %v2029, %v2028
    %v2521 = vpack.c.b16 %v2031, %v2030
    %v2522 = vpack.c.b16 %v2033, %v2032
    %v2523 = vpack.c.b16 %v2035, %v2034
    %v2524 = vpack.c.b16 %v2037, %v2036
    %v2525 = vpack.c.b16 %v2039, %v2038
    %v2526 = vpack.c.b16 %v2041, %v2040
    %v2527 = vpack.c.b16 %v2043, %v2042
    %v2528 = vpack.c.b16 %v2045, %v2044
    %v2529 = vpack.c.b16 %v2047, %v2046
    %v2530 = vpack.c.b16 %v2049, %v2048
    %v2531 = vpack.c.b16 %v2051, %v2050
    %v2532 = vpack.c.b16 %v2053, %v2052
    %v2533 = vpack.c.b16 %v2055, %v2054
    %v2534 = vpack.c.b16 %v2057, %v2056
    %v2535 = vpack.c.b16 %v2059, %v2058
    %v2536 = vpack.c.b16 %v2061, %v2060
    %v2537 = vpack.c.b16 %v2063, %v2062
    %v2538 = vpack.c.b16 %v2065, %v2064
    %v2539 = vpack.c.b16 %v2067, %v2066
    %v2540 = vpack.c.b16 %v2069, %v2068
    %v2541 = vpack.c.b16 %v2071, %v2070
    %v2542 = vpack.c.b16 %v2073, %v2072
    %v2543 = vpack.c.b16 %v2075, %v2074
    %v2544 = vpack.c.b16 %v2077, %v2076
    %v2545 = vpack.c.b16 %v2079, %v2078
    %v2546 = vpack.c.b16 %v2081, %v2080
    %v2547 = vpack.c.b16 %v2083, %v2082
    %v2548 = vpack.c.b16 %v2085, %v2084
    %v2549 = vpack.c.b16 %v2087, %v2086
    %v2550 = vpack.c.b16 %v2089, %v2088
    %v2551 = vpack.c.b16 %v2091, %v2090
    %v2552 = vpack.c.b16 %v2093, %v2092
    %v2553 = vpack.c.b16 %v2095, %v2094
    %v2554 = vpack.c.b16 %v2097, %v2096
    %v2555 = vpack.c.b16 %v2099, %v2098
    %v2556 = vpack.c.b16 %v2101, %v2100
    %v2557 = vpack.c.b16 %v2103, %v2102
    %v2558 = vpack.c.b16 %v2105, %v2104
    %v2559 = vpack.c.b16 %v2107, %v2106
    %v2560 = vpack.c.b16 %v2109, %v2108
    %v2561 = vpack.c.b16 %v2111, %v2110
    %v2562 = vpack.c.b16 %v2113, %v2112
    %v2563 = vpack.c.b16 %v2115, %v2114
    %v2564 = vpack.c.b16 %v2117, %v2116
    %v2565 = vpack.c.b16 %v2119, %v2118
    %v2566 = vpack.c.b16 %v2121, %v2120
    %v2567 = vpack.c.b16 %v2123, %v2122
    %v2568 = vpack.c.b16 %v2125, %v2124
    %v2569 = vpack.c.b16 %v2127, %v2126
    %v2570 = vpack.c.b16 %v2129, %v2128
    %v2571 = vpack.c.b16 %v2131, %v2130
    %v2572 = vpack.c.b16 %v2133, %v2132
    %v2573 = vpack.c.b16 %v2135, %v2134
    %v2574 = vpack.c.b16 %v2137, %v2136
    %v2575 = vpack.c.b16 %v2139, %v2138
    %v2576 = vpack.c.b16 %v2141, %v2140
    %v2577 = vpack.c.b16 %v2143, %v2142
    %v2578 = vpack.c.b16 %v2145, %v2144
    %v2579 = vpack.c.b16 %v2147, %v2146
    %v2580 = vpack.c.b16 %v2149, %v2148
    %v2581 = vpack.c.b16 %v2151, %v2150
    %v2582 = vpack.c.b16 %v2153, %v2152
    %v2583 = vpack.c.b16 %v2155, %v2154
    %v2584 = vpack.c.b16 %v2157, %v2156
    %v2585 = vpack.c.b16 %v2159, %v2158
    %v2586 = vpack.c.b16 %v2161, %v2160
    %v2587 = vpack.c.b16 %v2163, %v2162
    %v2588 = vpack.c.b16 %v2165, %v2164
    %v2589 = vpack.c.b16 %v2167, %v2166
    %v2590 = vpack.c.b16 %v2169, %v2168
    %v2591 = vpack.c.b16 %v2171, %v2170
    %v2592 = vpack.c.b16 %v2173, %v2172
    %v2593 = vpack.c.b16 %v2175, %v2174
    %v2594 = vpack.c.b16 %v2177, %v2176
    %v2595 = vpack.c.b16 %v2179, %v2178
    %v2596 = vpack.c.b16 %v2181, %v2180
    %v2597 = vpack.c.b16 %v2183, %v2182
    %v2598 = vpack.c.b16 %v2185, %v2184
    %v2599 = vpack.c.b16 %v2187, %v2186
    %v2600 = vpack.c.b16 %v2189, %v2188
    %v2601 = vpack.c.b16 %v2191, %v2190
    %v2602 = vpack.c.b16 %v2193, %v2192
    %v2603 = vpack.c.b16 %v2195, %v2194
    %v2604 = vpack.c.b16 %v2197, %v2196
    %v2605 = vpack.c.b16 %v2199, %v2198
    %v2606 = vpack.c.b16 %v2201, %v2200
    %v2607 = vpack.c.b16 %v2203, %v2202
    %v2608 = vpack.c.b16 %v2205, %v2204
    %v2609 = vpack.c.b16 %v2207, %v2206
    %v2610 = vpack.c.b16 %v2209, %v2208
    %v2611 = vpack.c.b16 %v2211, %v2210
    %v2612 = vpack.c.b16 %v2213, %v2212
    %v2613 = vpack.c.b16 %v2215, %v2214
    %v2614 = vpack.c.b16 %v2217, %v2216
    %v2615 = vpack.c.b16 %v2219, %v2218
    %v2616 = vpack.c.b16 %v2221, %v2220
    %v2617 = vpack.c.b16 %v2223, %v2222
    %v2618 = vpack.c.b16 %v2225, %v2224
    %v2619 = vpack.c.b16 %v2227, %v2226
    %v2620 = vpack.c.b16 %v2229, %v2228
    %v2621 = vpack.c.b16 %v2231, %v2230
    %v2622 = vpack.c.b16 %v2233, %v2232
    %v2623 = vpack.c.b16 %v2235, %v2234
    %v2624 = vpack.c.b16 %v2237, %v2236
    %v2625 = vpack.c.b16 %v2239, %v2238
    %v2626 = vpack.c.b16 %v2241, %v2240
    %v2627 = vpack.c.b16 %v2243, %v2242
    %v2628 = vpack.c.b16 %v2245, %v2244
    %v2629 = vpack.c.b16 %v2247, %v2246
    %v2630 = vpack.c.b16 %v2249, %v2248
    %v2631 = vpack.c.b16 %v2251, %v2250
    %v2632 = vpack.c.b16 %v2253, %v2252
    %v2633 = vpack.c.b16 %v2255, %v2254
    %v2634 = vpack.c.b16 %v2257, %v2256
    %v2635 = vpack.c.b16 %v2259, %v2258
    %v2636 = vpack.c.b16 %v2261, %v2260
    %v2637 = vpack.c.b16 %v2263, %v2262
    %v2638 = vpack.c.b16 %v2265, %v2264
    %v2639 = vpack.c.b16 %v2267, %v2266
    %v2640 = vpack.c.b16 %v2269, %v2268
    %v2641 = vpack.c.b16 %v2271, %v2270
    %v2642 = vpack.c.b16 %v2273, %v2272
    %v2643 = vpack.c.b16 %v2275, %v2274
    %v2644 = vpack.c.b16 %v2277, %v2276
    %v2645 = vpack.c.b16 %v2279, %v2278
    %v2646 = vpack.c.b16 %v2281, %v2280
    %v2647 = vpack.c.b16 %v2283, %v2282
    %v2648 = vpack.c.b16 %v2285, %v2284
    %v2649 = vpack.c.b16 %v2287, %v2286
    %v2650 = vpack.c.b16 %v2289, %v2288
    %v2651 = vpack.c.b16 %v2291, %v2290
    %v2652 = vpack.c.b16 %v2293, %v2292
    %v2653 = vpack.c.b16 %v2295, %v2294
    %v2654 = vpack.c.b16 %v2297, %v2296
    %v2655 = vpack.c.b16 %v2299, %v2298
    %v2656 = vpack.c.b16 %v2301, %v2300
    %v2657 = vpack.c.b16 %v2303, %v2302
    %v2658 = vpack.c.b16 %v2305, %v2304
    %v2659 = vpack.c.b16 %v2307, %v2306
    %v2660 = vpack.c.b16 %v2309, %v2308
    %v2661 = vpack.c.b16 %v2311, %v2310
    %v2662 = vpack.c.b16 %v2313, %v2312
    %v2663 = vpack.c.b16 %v2315, %v2314
    %v2664 = vpack.c.b16 %v2317, %v2316
    %v2665 = vpack.c.b16 %v2319, %v2318
    %v2666 = vpack.c.b16 %v2321, %v2320
    %v2667 = vpack.c.b16 %v2323, %v2322
    %v2668 = vpack.c.b16 %v2325, %v2324
    %v2669 = vpack.c.b16 %v2327, %v2326
    %v2670 = vpack.c.b16 %v2329, %v2328
    %v2671 = vpack.c.b16 %v2331, %v2330
    %v2672 = vpack.c.b16 %v2333, %v2332
    %v2673 = vpack.c.b16 %v2335, %v2334
    %v2674 = vpack.c.b16 %v2337, %v2336
    %v2675 = vpack.c.b16 %v2339, %v2338
    %v2676 = vpack.c.b16 %v2341, %v2340
    %v2677 = vpack.c.b16 %v2343, %v2342
    %v2678 = vpack.c.b16 %v2345, %v2344
    %v2679 = vpack.c.b16 %v2347, %v2346
    %v2680 = vpack.c.b16 %v2349, %v2348
    %v2681 = vpack.c.b16 %v2351, %v2350
    %v2682 = vpack.c.b16 %v2353, %v2352
    %v2683 = vpack.c.b16 %v2355, %v2354
    %v2684 = vpack.c.b16 %v2357, %v2356
    %v2685 = vpack.c.b16 %v2359, %v2358
    %v2686 = vpack.c.b16 %v2361, %v2360
    %v2687 = vpack.c.b16 %v2363, %v2362
    %v2688 = vpack.c.b16 %v2365, %v2364
    %v2689 = vpack.c.b16 %v2367, %v2366
    %v2690 = vpack.c.b16 %v2369, %v2368
    %v2691 = vpack.c.b16 %v2371, %v2370
    %v2692 = vpack.c.b16 %v2373, %v2372
    %v2693 = vpack.c.b16 %v2375, %v2374
    %v2694 = vpack.c.b16 %v2377, %v2376
    %v2695 = vpack.c.b16 %v2379, %v2378
    %v2696 = vpack.c.b16 %v2381, %v2380
    %v2697 = vpack.c.b16 %v2383, %v2382
    %v2698 = vpack.c.b16 %v2385, %v2384
    %v2699 = vpack.c.b16 %v2387, %v2386
    %v2700 = vpack.c.b16 %v2389, %v2388
    %v2701 = vpack.c.b16 %v2391, %v2390
    %v2702 = vpack.c.b16 %v2393, %v2392
    %v2703 = vpack.c.b16 %v2395, %v2394
    %v2704 = vpack.c.b16 %v2397, %v2396
    %v2705 = vpack.c.b16 %v2399, %v2398
    %v2706 = vpack.c.b16 %v2401, %v2400
    %v2707 = vpack.c.b16 %v2403, %v2402
    %v2708 = vpack.c.b16 %v2405, %v2404
    %v2709 = vpack.c.b16 %v2407, %v2406
    %v2710 = vpack.c.b16 %v2409, %v2408
    %v2711 = vpack.c.b16 %v2411, %v2410
    %v2712 = vpack.c.b16 %v2413, %v2412
    %v2713 = vpack.c.b16 %v2415, %v2414
    %v2714 = vpack.c.b16 %v2417, %v2416
    %v2715 = vpack.c.b16 %v2419, %v2418
    %v2716 = vpack.c.b16 %v2421, %v2420
    %v2717 = vpack.c.b16 %v2423, %v2422
    %v2718 = vpack.c.b16 %v2425, %v2424
    %v2719 = vpack.c.b16 %v2427, %v2426
    %v2720 = vpack.c.b16 %v2429, %v2428
    %v2721 = vpack.c.b16 %v2431, %v2430
    %v2722 = vpack.c.b16 %v2433, %v2432
    %v2723 = vpack.c.b16 %v2435, %v2434
    %v2724 = vpack.c.b16 %v2437, %v2436
    %v2725 = vpack.c.b16 %v2439, %v2438
    %v2726 = vpack.c.b16 %v2441, %v2440
    %v2727 = vpack.c.b16 %v2443, %v2442
    %v2728 = vpack.c.b16 %v2445, %v2444
    %v2729 = vpack.c.b16 %v2447, %v2446
    %v2730 = vpack.c.b16 %v2449, %v2448
    %v2731 = vpack.c.b16 %v2451, %v2450
    %v2732 = vpack.c.b16 %v2453, %v2452
    %v2733 = vpack.c.b16 %v2455, %v2454
    %v2734 = vpack.c.b16 %v2457, %v2456
    %v2735 = vpack.c.b16 %v2459, %v2458
    %v2736 = vpack.c.b16 %v2461, %v2460
    %v2737 = vpack.c.b16 %v2463, %v2462
    %v2738 = vpack.c.b16 %v2465, %v2464
    %v2739 = vpack.c.b16 %v2467, %v2466
    %v2740 = vpack.c.b16 %v2469, %v2468
    %v2741 = vpack.c.b16 %v2471, %v2470
    %v2742 = vpack.c.b16 %v2473, %v2472
    %v2743 = vpack.c.b16 %v2475, %v2474
    %v2744 = vpack.c.b16 %v2477, %v2476
    %v2745 = vpack.c.b16 %v2479, %v2478
    %v2746 = vpack.c.b16 %v2481, %v2480
    %v2747 = vpack.c.b16 %v2483, %v2482
    %v2748 = vpack.c.b16 %v2485, %v2484
    %v2749 = vpack.c.b16 %v2487, %v2486
    %v2750 = vpack.c.b16 %v2489, %v2488
    %v2751 = vpack.c.b16 %v2491, %v2490
    %v2752 = vpack.c.b16 %v2493, %v2492
    %v2753 = vpack.c.b16 %v2495, %v2494
    %v2754 = vpack.c.b16 %v2497, %v2496
    %v2755 = vpack.c.b16 %v2499, %v2498
    %3012 = vmatpush.bf16.msra.mxu0 %v2507
    %3013 = vmatpush.bf16.msra.mxu0 %v2506
    %3014 = vmatpush.bf16.msra.mxu0 %v2505
    %3015 = vmatpush.bf16.msra.mxu0 %v2504
    %3016 = vmatpush.bf16.msra.mxu0 %v2503
    %3017 = vmatpush.bf16.msra.mxu0 %v2502
    %3018 = vmatpush.bf16.msra.mxu0 %v2501
    %3019 = vmatpush.bf16.msra.mxu0 %v2500
    %3020 = vmatmul.bf16.gmra.mxu0 %v932
    %v3021 = vpop.f32.mrf.mxu0
    %v3022 = vadd.f32 0.0, %v3021
    %v3023 = vpop.f32.mrf.mxu0
    %3024 = vdwg.mxu0
    %3025 = vmatpush.bf16.msra.mxu0 %v2515
    %3026 = vmatpush.bf16.msra.mxu0 %v2514
    %3027 = vmatpush.bf16.msra.mxu0 %v2513
    %3028 = vmatpush.bf16.msra.mxu0 %v2512
    %3029 = vmatpush.bf16.msra.mxu0 %v2511
    %3030 = vmatpush.bf16.msra.mxu0 %v2510
    %3031 = vmatpush.bf16.msra.mxu0 %v2509
    %3032 = vmatpush.bf16.msra.mxu0 %v2508
    %3033 = vmatmul.bf16.gmra.mxu0 %v933
    %v3034 = vpop.f32.mrf.mxu0
    %v3035 = vadd.f32 %v3022, %v3034
    %v3036 = vpop.f32.mrf.mxu0
    %3037 = vdwg.mxu0
    %3038 = vmatpush.bf16.msra.mxu0 %v2523
    %3039 = vmatpush.bf16.msra.mxu0 %v2522
    %3040 = vmatpush.bf16.msra.mxu0 %v2521
    %3041 = vmatpush.bf16.msra.mxu0 %v2520
    %3042 = vmatpush.bf16.msra.mxu0 %v2519
    %3043 = vmatpush.bf16.msra.mxu0 %v2518
    %3044 = vmatpush.bf16.msra.mxu0 %v2517
    %3045 = vmatpush.bf16.msra.mxu0 %v2516
    %3046 = vmatmul.bf16.gmra.mxu0 %v934
    %v3047 = vpop.f32.mrf.mxu0
    %v3048 = vadd.f32 %v3035, %v3047
    %v3049 = vpop.f32.mrf.mxu0
    %3050 = vdwg.mxu0
    %3051 = vmatpush.bf16.msra.mxu0 %v2531
    %3052 = vmatpush.bf16.msra.mxu0 %v2530
    %3053 = vmatpush.bf16.msra.mxu0 %v2529
    %3054 = vmatpush.bf16.msra.mxu0 %v2528
    %3055 = vmatpush.bf16.msra.mxu0 %v2527
    %3056 = vmatpush.bf16.msra.mxu0 %v2526
    %3057 = vmatpush.bf16.msra.mxu0 %v2525
    %3058 = vmatpush.bf16.msra.mxu0 %v2524
    %3059 = vmatmul.bf16.gmra.mxu0 %v935
    %v3060 = vpop.f32.mrf.mxu0
    %v3061 = vadd.f32 %v3048, %v3060
    %v3062 = vpop.f32.mrf.mxu0
    %3063 = vdwg.mxu0
    %3064 = vmatpush.bf16.msra.mxu0 %v2539
    %3065 = vmatpush.bf16.msra.mxu0 %v2538
    %3066 = vmatpush.bf16.msra.mxu0 %v2537
    %3067 = vmatpush.bf16.msra.mxu0 %v2536
    %3068 = vmatpush.bf16.msra.mxu0 %v2535
    %3069 = vmatpush.bf16.msra.mxu0 %v2534
    %3070 = vmatpush.bf16.msra.mxu0 %v2533
    %3071 = vmatpush.bf16.msra.mxu0 %v2532
    %3072 = vmatmul.bf16.gmra.mxu0 %v936
    %v3073 = vpop.f32.mrf.mxu0
    %v3074 = vadd.f32 %v3061, %v3073
    %v3075 = vpop.f32.mrf.mxu0
    %3076 = vdwg.mxu0
    %3077 = vmatpush.bf16.msra.mxu0 %v2547
    %3078 = vmatpush.bf16.msra.mxu0 %v2546
    %3079 = vmatpush.bf16.msra.mxu0 %v2545
    %3080 = vmatpush.bf16.msra.mxu0 %v2544
    %3081 = vmatpush.bf16.msra.mxu0 %v2543
    %3082 = vmatpush.bf16.msra.mxu0 %v2542
    %3083 = vmatpush.bf16.msra.mxu0 %v2541
    %3084 = vmatpush.bf16.msra.mxu0 %v2540
    %3085 = vmatmul.bf16.gmra.mxu0 %v937
    %v3086 = vpop.f32.mrf.mxu0
    %v3087 = vadd.f32 %v3074, %v3086
    %v3088 = vpop.f32.mrf.mxu0
    %3089 = vdwg.mxu0
    %3090 = vmatpush.bf16.msra.mxu0 %v2555
    %3091 = vmatpush.bf16.msra.mxu0 %v2554
    %3092 = vmatpush.bf16.msra.mxu0 %v2553
    %3093 = vmatpush.bf16.msra.mxu0 %v2552
    %3094 = vmatpush.bf16.msra.mxu0 %v2551
    %3095 = vmatpush.bf16.msra.mxu0 %v2550
    %3096 = vmatpush.bf16.msra.mxu0 %v2549
    %3097 = vmatpush.bf16.msra.mxu0 %v2548
    %3098 = vmatmul.bf16.gmra.mxu0 %v938
    %v3099 = vpop.f32.mrf.mxu0
    %v3100 = vadd.f32 %v3087, %v3099
    %v3101 = vpop.f32.mrf.mxu0
    %3102 = vdwg.mxu0
    %3103 = vmatpush.bf16.msra.mxu0 %v2563
    %3104 = vmatpush.bf16.msra.mxu0 %v2562
    %3105 = vmatpush.bf16.msra.mxu0 %v2561
    %3106 = vmatpush.bf16.msra.mxu0 %v2560
    %3107 = vmatpush.bf16.msra.mxu0 %v2559
    %3108 = vmatpush.bf16.msra.mxu0 %v2558
    %3109 = vmatpush.bf16.msra.mxu0 %v2557
    %3110 = vmatpush.bf16.msra.mxu0 %v2556
    %3111 = vmatmul.bf16.gmra.mxu0 %v939
    %v3112 = vpop.f32.mrf.mxu0
    %v3113 = vadd.f32 %v3100, %v3112
    %v3114 = vpop.f32.mrf.mxu0
    %3115 = vdwg.mxu0
    %3116 = vmatpush.bf16.msra.mxu0 %v2571
    %3117 = vmatpush.bf16.msra.mxu0 %v2570
    %3118 = vmatpush.bf16.msra.mxu0 %v2569
    %3119 = vmatpush.bf16.msra.mxu0 %v2568
    %3120 = vmatpush.bf16.msra.mxu0 %v2567
    %3121 = vmatpush.bf16.msra.mxu0 %v2566
    %3122 = vmatpush.bf16.msra.mxu0 %v2565
    %3123 = vmatpush.bf16.msra.mxu0 %v2564
    %3124 = vmatmul.bf16.gmra.mxu0 %v940
    %v3125 = vpop.f32.mrf.mxu0
    %v3126 = vadd.f32 %v3113, %v3125
    %v3127 = vpop.f32.mrf.mxu0
    %3128 = vdwg.mxu0
    %3129 = vmatpush.bf16.msra.mxu0 %v2579
    %3130 = vmatpush.bf16.msra.mxu0 %v2578
    %3131 = vmatpush.bf16.msra.mxu0 %v2577
    %3132 = vmatpush.bf16.msra.mxu0 %v2576
    %3133 = vmatpush.bf16.msra.mxu0 %v2575
    %3134 = vmatpush.bf16.msra.mxu0 %v2574
    %3135 = vmatpush.bf16.msra.mxu0 %v2573
    %3136 = vmatpush.bf16.msra.mxu0 %v2572
    %3137 = vmatmul.bf16.gmra.mxu0 %v941
    %v3138 = vpop.f32.mrf.mxu0
    %v3139 = vadd.f32 %v3126, %v3138
    %v3140 = vpop.f32.mrf.mxu0
    %3141 = vdwg.mxu0
    %3142 = vmatpush.bf16.msra.mxu0 %v2587
    %3143 = vmatpush.bf16.msra.mxu0 %v2586
    %3144 = vmatpush.bf16.msra.mxu0 %v2585
    %3145 = vmatpush.bf16.msra.mxu0 %v2584
    %3146 = vmatpush.bf16.msra.mxu0 %v2583
    %3147 = vmatpush.bf16.msra.mxu0 %v2582
    %3148 = vmatpush.bf16.msra.mxu0 %v2581
    %3149 = vmatpush.bf16.msra.mxu0 %v2580
    %3150 = vmatmul.bf16.gmra.mxu0 %v942
    %v3151 = vpop.f32.mrf.mxu0
    %v3152 = vadd.f32 %v3139, %v3151
    %v3153 = vpop.f32.mrf.mxu0
    %3154 = vdwg.mxu0
    %3155 = vmatpush.bf16.msra.mxu0 %v2595
    %3156 = vmatpush.bf16.msra.mxu0 %v2594
    %3157 = vmatpush.bf16.msra.mxu0 %v2593
    %3158 = vmatpush.bf16.msra.mxu0 %v2592
    %3159 = vmatpush.bf16.msra.mxu0 %v2591
    %3160 = vmatpush.bf16.msra.mxu0 %v2590
    %3161 = vmatpush.bf16.msra.mxu0 %v2589
    %3162 = vmatpush.bf16.msra.mxu0 %v2588
    %3163 = vmatmul.bf16.gmra.mxu0 %v943
    %v3164 = vpop.f32.mrf.mxu0
    %v3165 = vadd.f32 %v3152, %v3164
    %v3166 = vpop.f32.mrf.mxu0
    %3167 = vdwg.mxu0
    %3168 = vmatpush.bf16.msra.mxu0 %v2603
    %3169 = vmatpush.bf16.msra.mxu0 %v2602
    %3170 = vmatpush.bf16.msra.mxu0 %v2601
    %3171 = vmatpush.bf16.msra.mxu0 %v2600
    %3172 = vmatpush.bf16.msra.mxu0 %v2599
    %3173 = vmatpush.bf16.msra.mxu0 %v2598
    %3174 = vmatpush.bf16.msra.mxu0 %v2597
    %3175 = vmatpush.bf16.msra.mxu0 %v2596
    %3176 = vmatmul.bf16.gmra.mxu0 %v944
    %v3177 = vpop.f32.mrf.mxu0
    %v3178 = vadd.f32 %v3165, %v3177
    %v3179 = vpop.f32.mrf.mxu0
    %3180 = vdwg.mxu0
    %3181 = vmatpush.bf16.msra.mxu0 %v2611
    %3182 = vmatpush.bf16.msra.mxu0 %v2610
    %3183 = vmatpush.bf16.msra.mxu0 %v2609
    %3184 = vmatpush.bf16.msra.mxu0 %v2608
    %3185 = vmatpush.bf16.msra.mxu0 %v2607
    %3186 = vmatpush.bf16.msra.mxu0 %v2606
    %3187 = vmatpush.bf16.msra.mxu0 %v2605
    %3188 = vmatpush.bf16.msra.mxu0 %v2604
    %3189 = vmatmul.bf16.gmra.mxu0 %v945
    %v3190 = vpop.f32.mrf.mxu0
    %v3191 = vadd.f32 %v3178, %v3190
    %v3192 = vpop.f32.mrf.mxu0
    %3193 = vdwg.mxu0
    %3194 = vmatpush.bf16.msra.mxu0 %v2619
    %3195 = vmatpush.bf16.msra.mxu0 %v2618
    %3196 = vmatpush.bf16.msra.mxu0 %v2617
    %3197 = vmatpush.bf16.msra.mxu0 %v2616
    %3198 = vmatpush.bf16.msra.mxu0 %v2615
    %3199 = vmatpush.bf16.msra.mxu0 %v2614
    %3200 = vmatpush.bf16.msra.mxu0 %v2613
    %3201 = vmatpush.bf16.msra.mxu0 %v2612
    %3202 = vmatmul.bf16.gmra.mxu0 %v946
    %v3203 = vpop.f32.mrf.mxu0
    %v3204 = vadd.f32 %v3191, %v3203
    %v3205 = vpop.f32.mrf.mxu0
    %3206 = vdwg.mxu0
    %3207 = vmatpush.bf16.msra.mxu0 %v2627
    %3208 = vmatpush.bf16.msra.mxu0 %v2626
    %3209 = vmatpush.bf16.msra.mxu0 %v2625
    %3210 = vmatpush.bf16.msra.mxu0 %v2624
    %3211 = vmatpush.bf16.msra.mxu0 %v2623
    %3212 = vmatpush.bf16.msra.mxu0 %v2622
    %3213 = vmatpush.bf16.msra.mxu0 %v2621
    %3214 = vmatpush.bf16.msra.mxu0 %v2620
    %3215 = vmatmul.bf16.gmra.mxu0 %v947
    %v3216 = vpop.f32.mrf.mxu0
    %v3217 = vadd.f32 %v3204, %v3216
    %v3218 = vpop.f32.mrf.mxu0
    %3219 = vdwg.mxu0
    %3220 = vmatpush.bf16.msra.mxu0 %v2635
    %3221 = vmatpush.bf16.msra.mxu0 %v2634
    %3222 = vmatpush.bf16.msra.mxu0 %v2633
    %3223 = vmatpush.bf16.msra.mxu0 %v2632
    %3224 = vmatpush.bf16.msra.mxu0 %v2631
    %3225 = vmatpush.bf16.msra.mxu0 %v2630
    %3226 = vmatpush.bf16.msra.mxu0 %v2629
    %3227 = vmatpush.bf16.msra.mxu0 %v2628
    %3228 = vmatmul.bf16.gmra.mxu0 %v948
    %v3229 = vpop.f32.mrf.mxu0
    %v3230 = vadd.f32 %v3217, %v3229
    %v3231 = vpop.f32.mrf.mxu0
    %3232 = vdwg.mxu0
    %3233 = vmatpush.bf16.msra.mxu0 %v2643
    %3234 = vmatpush.bf16.msra.mxu0 %v2642
    %3235 = vmatpush.bf16.msra.mxu0 %v2641
    %3236 = vmatpush.bf16.msra.mxu0 %v2640
    %3237 = vmatpush.bf16.msra.mxu0 %v2639
    %3238 = vmatpush.bf16.msra.mxu0 %v2638
    %3239 = vmatpush.bf16.msra.mxu0 %v2637
    %3240 = vmatpush.bf16.msra.mxu0 %v2636
    %3241 = vmatmul.bf16.gmra.mxu0 %v949
    %v3242 = vpop.f32.mrf.mxu0
    %v3243 = vadd.f32 %v3230, %v3242
    %v3244 = vpop.f32.mrf.mxu0
    %3245 = vdwg.mxu0
    %3246 = vmatpush.bf16.msra.mxu0 %v2651
    %3247 = vmatpush.bf16.msra.mxu0 %v2650
    %3248 = vmatpush.bf16.msra.mxu0 %v2649
    %3249 = vmatpush.bf16.msra.mxu0 %v2648
    %3250 = vmatpush.bf16.msra.mxu0 %v2647
    %3251 = vmatpush.bf16.msra.mxu0 %v2646
    %3252 = vmatpush.bf16.msra.mxu0 %v2645
    %3253 = vmatpush.bf16.msra.mxu0 %v2644
    %3254 = vmatmul.bf16.gmra.mxu0 %v950
    %v3255 = vpop.f32.mrf.mxu0
    %v3256 = vadd.f32 %v3243, %v3255
    %v3257 = vpop.f32.mrf.mxu0
    %3258 = vdwg.mxu0
    %3259 = vmatpush.bf16.msra.mxu0 %v2659
    %3260 = vmatpush.bf16.msra.mxu0 %v2658
    %3261 = vmatpush.bf16.msra.mxu0 %v2657
    %3262 = vmatpush.bf16.msra.mxu0 %v2656
    %3263 = vmatpush.bf16.msra.mxu0 %v2655
    %3264 = vmatpush.bf16.msra.mxu0 %v2654
    %3265 = vmatpush.bf16.msra.mxu0 %v2653
    %3266 = vmatpush.bf16.msra.mxu0 %v2652
    %3267 = vmatmul.bf16.gmra.mxu0 %v951
    %v3268 = vpop.f32.mrf.mxu0
    %v3269 = vadd.f32 %v3256, %v3268
    %v3270 = vpop.f32.mrf.mxu0
    %3271 = vdwg.mxu0
    %3272 = vmatpush.bf16.msra.mxu0 %v2667
    %3273 = vmatpush.bf16.msra.mxu0 %v2666
    %3274 = vmatpush.bf16.msra.mxu0 %v2665
    %3275 = vmatpush.bf16.msra.mxu0 %v2664
    %3276 = vmatpush.bf16.msra.mxu0 %v2663
    %3277 = vmatpush.bf16.msra.mxu0 %v2662
    %3278 = vmatpush.bf16.msra.mxu0 %v2661
    %3279 = vmatpush.bf16.msra.mxu0 %v2660
    %3280 = vmatmul.bf16.gmra.mxu0 %v952
    %v3281 = vpop.f32.mrf.mxu0
    %v3282 = vadd.f32 %v3269, %v3281
    %v3283 = vpop.f32.mrf.mxu0
    %3284 = vdwg.mxu0
    %3285 = vmatpush.bf16.msra.mxu0 %v2675
    %3286 = vmatpush.bf16.msra.mxu0 %v2674
    %3287 = vmatpush.bf16.msra.mxu0 %v2673
    %3288 = vmatpush.bf16.msra.mxu0 %v2672
    %3289 = vmatpush.bf16.msra.mxu0 %v2671
    %3290 = vmatpush.bf16.msra.mxu0 %v2670
    %3291 = vmatpush.bf16.msra.mxu0 %v2669
    %3292 = vmatpush.bf16.msra.mxu0 %v2668
    %3293 = vmatmul.bf16.gmra.mxu0 %v953
    %v3294 = vpop.f32.mrf.mxu0
    %v3295 = vadd.f32 %v3282, %v3294
    %v3296 = vpop.f32.mrf.mxu0
    %3297 = vdwg.mxu0
    %3298 = vmatpush.bf16.msra.mxu0 %v2683
    %3299 = vmatpush.bf16.msra.mxu0 %v2682
    %3300 = vmatpush.bf16.msra.mxu0 %v2681
    %3301 = vmatpush.bf16.msra.mxu0 %v2680
    %3302 = vmatpush.bf16.msra.mxu0 %v2679
    %3303 = vmatpush.bf16.msra.mxu0 %v2678
    %3304 = vmatpush.bf16.msra.mxu0 %v2677
    %3305 = vmatpush.bf16.msra.mxu0 %v2676
    %3306 = vmatmul.bf16.gmra.mxu0 %v954
    %v3307 = vpop.f32.mrf.mxu0
    %v3308 = vadd.f32 %v3295, %v3307
    %v3309 = vpop.f32.mrf.mxu0
    %3310 = vdwg.mxu0
    %3311 = vmatpush.bf16.msra.mxu0 %v2691
    %3312 = vmatpush.bf16.msra.mxu0 %v2690
    %3313 = vmatpush.bf16.msra.mxu0 %v2689
    %3314 = vmatpush.bf16.msra.mxu0 %v2688
    %3315 = vmatpush.bf16.msra.mxu0 %v2687
    %3316 = vmatpush.bf16.msra.mxu0 %v2686
    %3317 = vmatpush.bf16.msra.mxu0 %v2685
    %3318 = vmatpush.bf16.msra.mxu0 %v2684
    %3319 = vmatmul.bf16.gmra.mxu0 %v955
    %v3320 = vpop.f32.mrf.mxu0
    %v3321 = vadd.f32 %v3308, %v3320
    %v3322 = vpop.f32.mrf.mxu0
    %3323 = vdwg.mxu0
    %3324 = vmatpush.bf16.msra.mxu0 %v2699
    %3325 = vmatpush.bf16.msra.mxu0 %v2698
    %3326 = vmatpush.bf16.msra.mxu0 %v2697
    %3327 = vmatpush.bf16.msra.mxu0 %v2696
    %3328 = vmatpush.bf16.msra.mxu0 %v2695
    %3329 = vmatpush.bf16.msra.mxu0 %v2694
    %3330 = vmatpush.bf16.msra.mxu0 %v2693
    %3331 = vmatpush.bf16.msra.mxu0 %v2692
    %3332 = vmatmul.bf16.gmra.mxu0 %v956
    %v3333 = vpop.f32.mrf.mxu0
    %v3334 = vadd.f32 %v3321, %v3333
    %v3335 = vpop.f32.mrf.mxu0
    %3336 = vdwg.mxu0
    %3337 = vmatpush.bf16.msra.mxu0 %v2707
    %3338 = vmatpush.bf16.msra.mxu0 %v2706
    %3339 = vmatpush.bf16.msra.mxu0 %v2705
    %3340 = vmatpush.bf16.msra.mxu0 %v2704
    %3341 = vmatpush.bf16.msra.mxu0 %v2703
    %3342 = vmatpush.bf16.msra.mxu0 %v2702
    %3343 = vmatpush.bf16.msra.mxu0 %v2701
    %3344 = vmatpush.bf16.msra.mxu0 %v2700
    %3345 = vmatmul.bf16.gmra.mxu0 %v957
    %v3346 = vpop.f32.mrf.mxu0
    %v3347 = vadd.f32 %v3334, %v3346
    %v3348 = vpop.f32.mrf.mxu0
    %3349 = vdwg.mxu0
    %3350 = vmatpush.bf16.msra.mxu0 %v2715
    %3351 = vmatpush.bf16.msra.mxu0 %v2714
    %3352 = vmatpush.bf16.msra.mxu0 %v2713
    %3353 = vmatpush.bf16.msra.mxu0 %v2712
    %3354 = vmatpush.bf16.msra.mxu0 %v2711
    %3355 = vmatpush.bf16.msra.mxu0 %v2710
    %3356 = vmatpush.bf16.msra.mxu0 %v2709
    %3357 = vmatpush.bf16.msra.mxu0 %v2708
    %3358 = vmatmul.bf16.gmra.mxu0 %v958
    %v3359 = vpop.f32.mrf.mxu0
    %v3360 = vadd.f32 %v3347, %v3359
    %v3361 = vpop.f32.mrf.mxu0
    %3362 = vdwg.mxu0
    %3363 = vmatpush.bf16.msra.mxu0 %v2723
    %3364 = vmatpush.bf16.msra.mxu0 %v2722
    %3365 = vmatpush.bf16.msra.mxu0 %v2721
    %3366 = vmatpush.bf16.msra.mxu0 %v2720
    %3367 = vmatpush.bf16.msra.mxu0 %v2719
    %3368 = vmatpush.bf16.msra.mxu0 %v2718
    %3369 = vmatpush.bf16.msra.mxu0 %v2717
    %3370 = vmatpush.bf16.msra.mxu0 %v2716
    %3371 = vmatmul.bf16.gmra.mxu0 %v959
    %v3372 = vpop.f32.mrf.mxu0
    %v3373 = vadd.f32 %v3360, %v3372
    %v3374 = vpop.f32.mrf.mxu0
    %3375 = vdwg.mxu0
    %3376 = vmatpush.bf16.msra.mxu0 %v2731
    %3377 = vmatpush.bf16.msra.mxu0 %v2730
    %3378 = vmatpush.bf16.msra.mxu0 %v2729
    %3379 = vmatpush.bf16.msra.mxu0 %v2728
    %3380 = vmatpush.bf16.msra.mxu0 %v2727
    %3381 = vmatpush.bf16.msra.mxu0 %v2726
    %3382 = vmatpush.bf16.msra.mxu0 %v2725
    %3383 = vmatpush.bf16.msra.mxu0 %v2724
    %3384 = vmatmul.bf16.gmra.mxu0 %v960
    %v3385 = vpop.f32.mrf.mxu0
    %v3386 = vadd.f32 %v3373, %v3385
    %v3387 = vpop.f32.mrf.mxu0
    %3388 = vdwg.mxu0
    %3389 = vmatpush.bf16.msra.mxu0 %v2739
    %3390 = vmatpush.bf16.msra.mxu0 %v2738
    %3391 = vmatpush.bf16.msra.mxu0 %v2737
    %3392 = vmatpush.bf16.msra.mxu0 %v2736
    %3393 = vmatpush.bf16.msra.mxu0 %v2735
    %3394 = vmatpush.bf16.msra.mxu0 %v2734
    %3395 = vmatpush.bf16.msra.mxu0 %v2733
    %3396 = vmatpush.bf16.msra.mxu0 %v2732
    %3397 = vmatmul.bf16.gmra.mxu0 %v961
    %v3398 = vpop.f32.mrf.mxu0
    %v3399 = vadd.f32 %v3386, %v3398
    %v3400 = vpop.f32.mrf.mxu0
    %3401 = vdwg.mxu0
    %3402 = vmatpush.bf16.msra.mxu0 %v2747
    %3403 = vmatpush.bf16.msra.mxu0 %v2746
    %3404 = vmatpush.bf16.msra.mxu0 %v2745
    %3405 = vmatpush.bf16.msra.mxu0 %v2744
    %3406 = vmatpush.bf16.msra.mxu0 %v2743
    %3407 = vmatpush.bf16.msra.mxu0 %v2742
    %3408 = vmatpush.bf16.msra.mxu0 %v2741
    %3409 = vmatpush.bf16.msra.mxu0 %v2740
    %3410 = vmatmul.bf16.gmra.mxu0 %v962
    %v3411 = vpop.f32.mrf.mxu0
    %v3412 = vadd.f32 %v3399, %v3411
    %v3413 = vpop.f32.mrf.mxu0
    %3414 = vdwg.mxu0
    %3415 = vmatpush.bf16.msra.mxu0 %v2755
    %3416 = vmatpush.bf16.msra.mxu0 %v2754
    %3417 = vmatpush.bf16.msra.mxu0 %v2753
    %3418 = vmatpush.bf16.msra.mxu0 %v2752
    %3419 = vmatpush.bf16.msra.mxu0 %v2751
    %3420 = vmatpush.bf16.msra.mxu0 %v2750
    %3421 = vmatpush.bf16.msra.mxu0 %v2749
    %3422 = vmatpush.bf16.msra.mxu0 %v2748
    %3423 = vmatmul.bf16.gmra.mxu0 %v963
    %v3424 = vpop.f32.mrf.mxu0
    %v3425 = vadd.f32 %v3412, %v3424
    %v3426 = vpop.f32.mrf.mxu0
    %3427 = vdwg.mxu0
    %p3428 = scmp.eq.s32.totalorder 0, 0
    // Predicated region
    $region22: #{linear_classifier_forward.1} parent=1 // pred_check
      %p3429 = pneg %p3428
    $region23: #{linear_classifier_forward.1} parent=1 // pred_check_branch
      %3431 = sbr.rel (%p3429) target = $region25
    $region24: #{linear_classifier_forward.1} parent=1 // pred_region
      %v3432 = vld [vmem:[%s4] sm:$0x1]
      %v3434 = vperm.slane %v3432, 0
      %v3436 = vadd.f32 %v3425, %v3434
      %3437 = vst [vmem:[#allocation2] sm:$0xff] %v3436
    $region25: #{linear_classifier_forward.1} parent=1 // pred_fallthru
      _
    %p3438 = scmp.gt.s32.totalorder 0, 0
    // Predicated region
    $region26: #{linear_classifier_forward.1} parent=1 // pred_check
      %p3439 = pneg %p3438
    $region27: #{linear_classifier_forward.1} parent=1 // pred_check_branch
      %3441 = sbr.rel (%p3439) target = $region29
    $region28: #{linear_classifier_forward.1} parent=1 // pred_region
      %v3442 = vld [vmem:[#allocation2] sm:$0xff]
      %v3443 = vadd.f32 %v3442, %v3425
      %3444 = vst [vmem:[#allocation2] sm:$0xff] %v3443
    $region29: #{linear_classifier_forward.1} parent=1 // pred_fallthru
      _
    // Predicated region
    $region30: #{linear_classifier_forward.1} parent=1 // pred_check
      _
    $region31: #{linear_classifier_forward.1} parent=1 // pred_check_branch
      %3446 = sbr.rel (0) target = $region33
    $region32: #{linear_classifier_forward.1} parent=1 // pred_region
      %3448 = vsyncadd [#allocation3], 0
      %s3450 = sshll.u32 [#allocation2], 4
      %s3451 = int_to_ptr.vmem [resolvable:$true] %s3450
      %s3452 = sshll.u32 %s5, 4
      %s3453 = int_to_ptr.hbm [resolvable:$true] %s3452
      %3455 = dma.vmem_to_hbm [thread:$0]  %s3451, 128, %s3453, [#allocation3]
    $region33: #{linear_classifier_forward.1} parent=1 // pred_fallthru
      _
    // Predicated region
    $region34: #{linear_classifier_forward.1} parent=1 // pred_check
      _
    $region35: #{linear_classifier_forward.1} parent=1 // pred_check_branch
      %3457 = sbr.rel (0) target = $region37
    $region36: #{linear_classifier_forward.1} parent=1 // pred_region
      %3459 = dma.done [#allocation3], 128
    $region37: #{linear_classifier_forward.1} parent=1 // pred_fallthru
      _
    %3460 = vsyncpa [#allocation3], 1

</llo_original>
